<compile_context>
chip_gen: v7x
topology: tpu7x:2x2x1
jax: 0.10.0
libtpu: 0.0.40
codegen_flags: <defaults>
</compile_context>

<pallas_src>
import functools
import math

import jax
import jax.numpy as jnp
from jax import lax
from jax.experimental import pallas as pl
from jax.experimental.pallas import tpu as pltpu

_EPS = 1e-12  # matches torch.nn.functional.normalize default eps (clamp_min)


# ---------------------------------------------------------------------------
# Fused kernel: one (N, tn) adjacency column slab per grid step.
# ---------------------------------------------------------------------------
def _fused_adj_kernel(x_ref, w_ref, adj_ref, *, threshold, sag_pool):
    # x_ref:   (1, N, D)   node features for batch b
    # w_ref:   (N, tn)     column tile of the glorot weight
    # adj_ref: (1, N, tn)  adjacency column slab to produce
    x = x_ref[0]                                                 # (N, D)
    ss = jnp.sum(x * x, axis=1, keepdims=True)                   # (N, 1)
    # x / clamp_min(||x||, eps)  ==  x * rsqrt(max(||x||^2, eps^2))
    x1 = x * lax.rsqrt(jnp.maximum(ss, _EPS * _EPS))             # (N, D)

    # t = x1^T @ W_tile, contraction over N (no explicit transpose copy).
    t = lax.dot_general(
        x1, w_ref[...],
        dimension_numbers=(((0,), (0,)), ((), ())),
        preferred_element_type=jnp.float32)                      # (D, tn)

    # One column slab of b = (x1 x1^T) W == x1 (x1^T W).
    bcol = jnp.dot(x1, t, preferred_element_type=jnp.float32)    # (N, tn)

    # F.normalize(b, p=1, dim=1): per-column L1 norm over the node (row) axis.
    colnorm = jnp.maximum(jnp.sum(jnp.abs(bcol), axis=0, keepdims=True), _EPS)

    if sag_pool:
        # relu(tanh(bcol / colnorm)) >= thr  <=>  bcol >= atanh(thr) * colnorm
        # (tanh is monotone and colnorm > 0) -> no tanh and no divide at all.
        athr = math.atanh(threshold)
        adj = jnp.where(bcol >= athr * colnorm, 1.0, 0.0)
    else:
        # tn reciprocals + N*tn multiplies instead of N*tn divides.
        # (approx=True would push this onto the idle EUP slot but can flip
        #  values sitting exactly at the 0.1 threshold vs. the f32 reference.)
        inv = pl.reciprocal(colnorm, approx=False)               # (1, tn)
        v = jnp.maximum(jnp.tanh(bcol * inv), 0.0)               # relu(tanh(c))
        adj = jnp.where(v < threshold, 0.0, v)

    adj_ref[0] = adj.astype(adj_ref.dtype)


# ---------------------------------------------------------------------------
# VMEM-aware column-tile picker.
# ---------------------------------------------------------------------------
def _pick_tn(n_pad, d, vmem_budget_bytes=20 * 1024 * 1024):
    """Largest 128-multiple column tile whose double-buffered blocks plus
    in-kernel temporaries fit comfortably in VMEM on every TPU generation."""
    for cand in (512, 256, 128):
        if n_pad % cand:
            continue
        blocks = 2 * (n_pad * d + n_pad * cand + n_pad * cand)   # x, W, out (x2 buffers)
        temps = n_pad * d + d * cand + 2 * n_pad * cand          # x1, t, bcol, adj
        if 4 * (blocks + temps) <= vmem_budget_bytes:
            return cand
    return 128


# ---------------------------------------------------------------------------
# Wrapper: full option-2 forward.
# ---------------------------------------------------------------------------
def graph_constructor_forward(x, weight, *, pool_method=None, threshold=0.1, tn=None):
    """option == 2 path of graph_constructor.forward; `idx` is unused there."""
    B, N, D = x.shape
    assert weight.shape == (N, N)
    x = x.astype(jnp.float32)
    weight = weight.astype(jnp.float32)

    # Pad the node axis to a multiple of 128 so every output store is
    # lane-dense (zero padding is exact for this computation; cropped below).
    n_pad = ((N + 127) // 128) * 128
    if n_pad != N:
        x = jnp.pad(x, ((0, 0), (0, n_pad - N), (0, 0)))
        weight = jnp.pad(weight, ((0, n_pad - N), (0, n_pad - N)))

    if tn is None:
        tn = _pick_tn(n_pad, D)
    assert n_pad % tn == 0 and tn % 128 == 0
    nj = n_pad // tn

    # Estimated VMEM footprint (f32): double-buffered blocks + temporaries.
    est = 4 * (2 * (n_pad * D + n_pad * tn + n_pad * tn)
               + (n_pad * D + D * tn + 2 * n_pad * tn))
    vmem_limit = int(min(48 * 1024 * 1024, max(16 * 1024 * 1024, 2 * est)))

    kern = functools.partial(_fused_adj_kernel, threshold=threshold,
                             sag_pool=(pool_method == "SAGPool"))

    adj = pl.pallas_call(
        kern,
        out_shape=jax.ShapeDtypeStruct((B, n_pad, n_pad), jnp.float32),
        grid=(nj, B),  # j outer, b inner: each W column tile is DMA'd once total
        in_specs=[
            pl.BlockSpec((1, n_pad, D), lambda j, b: (b, 0, 0)),
            pl.BlockSpec((n_pad, tn), lambda j, b: (0, j)),
        ],
        out_specs=pl.BlockSpec((1, n_pad, tn), lambda j, b: (b, 0, j)),
        compiler_params=pltpu.CompilerParams(
            dimension_semantics=("parallel", "parallel"),
            vmem_limit_bytes=vmem_limit),
    )(x, weight)

    if n_pad != N:
        adj = adj[:, :N, :N]
    return adj


if __name__ == "__main__":
    B, N, D = 2, 256, 32       # batch, nnodes, feature dim of x

    key = jax.random.PRNGKey(0)
    kx, kw = jax.random.split(key)
    x = jax.random.normal(kx, (B, N, D), jnp.float32)
    # glorot / xavier_normal_ on an (N, N) weight: std = sqrt(2 / (N + N))
    weight = jax.random.normal(kw, (N, N), jnp.float32) * jnp.sqrt(1.0 / N)

    # `idx` argument of the original forward is unused on the option == 2 path.
    adj_none = graph_constructor_forward(x, weight, pool_method=None)
    adj_sag = graph_constructor_forward(x, weight, pool_method="SAGPool")
    jax.block_until_ready((adj_none, adj_sag))

    # Pure-JAX reference following the PyTorch forward exactly.
    x1 = x / jnp.maximum(jnp.sqrt(jnp.sum(x * x, axis=2, keepdims=True)), 1e-12)
    a = jnp.einsum("bnd,bmd->bnm", x1, x1)
    b = jnp.einsum("bnm,mk->bnk", a, weight)
    c = b / jnp.maximum(jnp.sum(jnp.abs(b), axis=1, keepdims=True), 1e-12)
    v = jnp.maximum(jnp.tanh(c), 0.0)
    ref_none = jnp.where(v < 0.1, 0.0, v)
    ref_sag = jnp.where(v >= 0.1, 1.0, 0.0)

    assert jnp.allclose(adj_none, ref_none, atol=1e-4), "adjacency mismatch (pool_method=None)"
    assert jnp.allclose(adj_sag, ref_sag, atol=1e-4), "adjacency mismatch (pool_method='SAGPool')"

    print("KERNEL_OK")
</pallas_src>

<mosaic_0001>
module attributes {stable_mosaic.version = 11 : i64} {
  func.func @_fused_adj_kernel(%arg0: i32, %arg1: i32, %arg2: memref<1x256x32xf32, #tpu.memory_space<vmem>>, %arg3: memref<256x256xf32, #tpu.memory_space<vmem>>, %arg4: memref<1x256x256xf32, #tpu.memory_space<vmem>>) attributes {dimension_semantics = [#tpu.dimension_semantics<parallel>, #tpu.dimension_semantics<parallel>], iteration_bounds = array<i64: 1, 2>, scalar_prefetch = 0 : i64, scratch_operands = 0 : i64, tpu.core_type = #tpu.core_type<tc>, window_params = [{transform_indices = @transform_0, window_bounds = array<i64: 1, 256, 32>}, {transform_indices = @transform_1, window_bounds = array<i64: 256, 256>}, {transform_indices = @transform_2, window_bounds = array<i64: 1, 256, 256>}]} {
    %c0 = arith.constant 0 : index
    %c0_0 = arith.constant 0 : index
    %c0_1 = arith.constant 0 : index
    %0 = vector.load %arg2[%c0, %c0_0, %c0_1] : memref<1x256x32xf32, #tpu.memory_space<vmem>>, vector<1x256x32xf32>
    %1 = vector.shape_cast %0 : vector<1x256x32xf32> to vector<256x32xf32>
    %2 = arith.mulf %1, %1 : vector<256x32xf32>
    %cst = arith.constant dense<0.000000e+00> : vector<256xf32>
    %3 = vector.multi_reduction <add>, %2, %cst [1] : vector<256x32xf32> to vector<256xf32>
    %4 = vector.shape_cast %3 : vector<256xf32> to vector<256x1xf32>
    %cst_2 = arith.constant 1.000000e-24 : f32
    %5 = vector.broadcast %cst_2 : f32 to vector<256x1xf32>
    %6 = arith.maximumf %4, %5 : vector<256x1xf32>
    %7 = math.rsqrt %6 : vector<256x1xf32>
    %8 = vector.broadcast %7 : vector<256x1xf32> to vector<256x32xf32>
    %9 = arith.mulf %1, %8 : vector<256x32xf32>
    %c0_3 = arith.constant 0 : index
    %c0_4 = arith.constant 0 : index
    %10 = vector.load %arg3[%c0_3, %c0_4] : memref<256x256xf32, #tpu.memory_space<vmem>>, vector<256x256xf32>
    %cst_5 = arith.constant dense<0.000000e+00> : vector<32x256xf32>
    %11 = tpu.matmul %9, %10, %cst_5 {dimension_numbers = #tpu.dot_dimension_numbers<[0], [0], [1], [1], [0, 1, 1, 1], [], []>} : vector<256x32xf32>, vector<256x256xf32>, vector<32x256xf32> -> vector<32x256xf32>
    %cst_6 = arith.constant dense<0.000000e+00> : vector<256x256xf32>
    %12 = tpu.matmul %9, %11, %cst_6 {dimension_numbers = #tpu.dot_dimension_numbers<[1], [0], [0], [1], [0, 0, 1, 1], [], []>} : vector<256x32xf32>, vector<32x256xf32>, vector<256x256xf32> -> vector<256x256xf32>
    %13 = math.absf %12 : vector<256x256xf32>
    %cst_7 = arith.constant dense<0.000000e+00> : vector<256xf32>
    %14 = vector.multi_reduction <add>, %13, %cst_7 [0] : vector<256x256xf32> to vector<256xf32>
    %15 = vector.shape_cast %14 : vector<256xf32> to vector<1x256xf32>
    %cst_8 = arith.constant 9.99999996E-13 : f32
    %16 = vector.broadcast %cst_8 : f32 to vector<1x256xf32>
    %17 = arith.maximumf %15, %16 : vector<1x256xf32>
    %18 = tpu.reciprocal %17 : vector<1x256xf32> -> vector<1x256xf32>
    %19 = vector.broadcast %18 : vector<1x256xf32> to vector<256x256xf32>
    %20 = arith.mulf %12, %19 : vector<256x256xf32>
    %21 = math.tanh %20 : vector<256x256xf32>
    %cst_9 = arith.constant 0.000000e+00 : f32
    %22 = vector.broadcast %cst_9 : f32 to vector<256x256xf32>
    %23 = arith.maximumf %21, %22 : vector<256x256xf32>
    %cst_10 = arith.constant 1.000000e-01 : f32
    %24 = vector.broadcast %cst_10 : f32 to vector<256x256xf32>
    %25 = arith.cmpf olt, %23, %24 : vector<256x256xf32>
    %cst_11 = arith.constant 0.000000e+00 : f32
    %26 = vector.broadcast %cst_11 : f32 to vector<256x256xf32>
    %27 = arith.select %25, %26, %23 : vector<256x256xi1>, vector<256x256xf32>
    %c0_12 = arith.constant 0 : index
    %c0_13 = arith.constant 0 : index
    %c0_14 = arith.constant 0 : index
    %28 = vector.load %arg4[%c0_12, %c0_13, %c0_14] : memref<1x256x256xf32, #tpu.memory_space<vmem>>, vector<1x256x256xf32>
    %29 = vector.shape_cast %28 : vector<1x256x256xf32> to vector<256x256xf32>
    %30 = vector.shape_cast %27 : vector<256x256xf32> to vector<1x256x256xf32>
    tpu.vector_store %arg4[%c0_12, %c0_13, %c0_14], %30 {strides = array<i32>} : memref<1x256x256xf32, #tpu.memory_space<vmem>>, vector<1x256x256xf32>,
    return
  }
  func.func @transform_0(%arg0: i32, %arg1: i32) -> (i32, i32, i32) {
    %c0_i32 = arith.constant 0 : i32
    %c0_i32_0 = arith.constant 0 : i32
    %c0_i32_1 = arith.constant 0 : i32
    return %arg1, %c0_i32, %c0_i32_0 : i32, i32, i32
  }
  func.func @transform_1(%arg0: i32, %arg1: i32) -> (i32, i32) {
    %c0_i32 = arith.constant 0 : i32
    %c0_i32_0 = arith.constant 0 : i32
    return %c0_i32, %arg0 : i32, i32
  }
  func.func @transform_2(%arg0: i32, %arg1: i32) -> (i32, i32, i32) {
    %c0_i32 = arith.constant 0 : i32
    %c0_i32_0 = arith.constant 0 : i32
    return %arg1, %c0_i32, %arg0 : i32, i32, i32
  }
}

</mosaic_0001>

<llo_original>
// kernel: tpu_custom_call.1
$region0: #{tpu_custom_call.1}
  #allocation0 [shape = 'u32[]', space=smem, size = 0x4, offset = 0x4, fixed_abs, tag = 'smem constant byte address 0x4 - core index']
  #allocation1 [shape = 'u32[144,128]{1,0:T(1,128)}', space=vmem, size = 0x12000, scoped, tag = 'internal scratch']
  %s0 = inlined_call_operand.vmem [shape: f32[2,256,32], index: 0, kind: input, shape index: {}]
  %s1 = inlined_call_operand.vmem [shape: f32[256,256], index: 1, kind: input, shape index: {}]
  %s2 = inlined_call_operand.hbm [shape: f32[2,256,256], index: 2, kind: output, shape index: {}]
  %s3 = sld [smem:[#allocation0]]
  $region41: #{tpu_custom_call.1} parent=0
    _
  %s5 = ssub.s32 1, %s3
  %s6 = scalar_select 0, %s5, %s3
  $region1: #{tpu_custom_call.1} parent=0
    #allocation2 [shape = 'u8[524288]{0}', space=vmem, size = 0x80000, scoped, tag = 'output window, operand 0']
    #allocation3 [shape = 's32[2]{0}', space=sflag, size = 0x8, scoped, tag = 'scoped memory for tpu_custom_call.1']
    %7 = vsyncpa [#allocation3], 0
    %s8 = scalar_lea.sflag [#allocation3], 1
    %9 = vsyncpa %s8, 0
    loop: start=0, step=1, limit=4
    $region2: #{tpu_custom_call.1} parent=1 // loop_pre_header
      _
    $region3: #{tpu_custom_call.1} parent=1 // loop_header
      %s11 = sphi 0, %s15
      %p12 = scmp.ge.s32.totalorder %s11, 4
      %s18 = sphi 0, %s30
      %s19 = sphi 0, %s26
      %s20 = sphi 0, %s18
      %s21 = sphi 0, %s19
      %s22 = sphi 0, %s20
      %s23 = sphi 0, %s21
      %s33 = sphi 0, %s35
      %s36 = sphi 0, %s33
      %s37 = sphi 0, %s36
      %s53 = sphi 0, %s37
      %s59 = sphi 0, %s61
      %s62 = sphi 0, %s59
      %s63 = sphi 0, %s62
      %s79 = sphi 0, %s63
      %s87 = sphi 0, %s89
      %s90 = sphi 0, %s87
      %s91 = sphi 0, %s90
      %s107 = sphi 0, %s91
    $region4: #{tpu_custom_call.1} parent=1 // loop_header_branch
      %14 = sbr.rel (%p12) target = $region8
    $region5: #{tpu_custom_call.1} parent=1 // loop_body
      %s16 = ssub.s32 %s11, 1
      %s17 = ssub.s32 %s11, 2
      %s24 = sadd.s32 1, %s19
      %p25 = scmp.ge.s32.totalorder %s24, 2
      %s26 = scalar_select %p25, 0, %s24
      %s27 = sadd.s32 1, %s18
      %s28 = scalar_select %p25, %s27, %s18
      %p29 = scmp.ge.s32.totalorder %s28, 1
      %s30 = scalar_select %p29, 0, %s28
      %s31 = ssub.s32 %s19, %s26
      %p32 = scmp.eq.s32.totalorder %s31, 0
      %s34 = sadd.s32 %s33, 1
      %s35 = scalar_select %p32, %s33, %s34
      %p38 = pneg %p32
      %p39 = scmp.eq.s32.totalorder %s11, 1
      %p40 = por %p38, %p39
      %p41 = scmp.ne.s32.totalorder %s33, %s36
      %p42 = scmp.eq.s32.totalorder %s11, 0
      %p43 = por %p41, %p42
      %p44 = scmp.ne.s32.totalorder %s33, %s36
      %p45 = scmp.eq.s32.totalorder %s16, 1
      %p46 = por %p44, %p45
      %p47 = scmp.ne.s32.totalorder %s36, %s37
      %p48 = scmp.eq.s32.totalorder %s16, 0
      %p49 = por %p47, %p48
      %p50 = scmp.ne.s32.totalorder %s36, %s37
      %p51 = scmp.eq.s32.totalorder %s17, 1
      %p52 = por %p50, %p51
      %p54 = scmp.ne.s32.totalorder %s37, %s53
      %p55 = scmp.eq.s32.totalorder %s17, 0
      %p56 = por %p54, %p55
      %s57 = ssub.s32 %s18, %s30
      %p58 = scmp.eq.s32.totalorder %s57, 0
      %s60 = sadd.s32 %s59, 1
      %s61 = scalar_select %p58, %s59, %s60
      %p64 = pneg %p58
      %p65 = scmp.eq.s32.totalorder %s11, 1
      %p66 = por %p64, %p65
      %p67 = scmp.ne.s32.totalorder %s59, %s62
      %p68 = scmp.eq.s32.totalorder %s11, 0
      %p69 = por %p67, %p68
      %p70 = scmp.ne.s32.totalorder %s59, %s62
      %p71 = scmp.eq.s32.totalorder %s16, 1
      %p72 = por %p70, %p71
      %p73 = scmp.ne.s32.totalorder %s62, %s63
      %p74 = scmp.eq.s32.totalorder %s16, 0
      %p75 = por %p73, %p74
      %p76 = scmp.ne.s32.totalorder %s62, %s63
      %p77 = scmp.eq.s32.totalorder %s17, 1
      %p78 = por %p76, %p77
      %p80 = scmp.ne.s32.totalorder %s63, %s79
      %p81 = scmp.eq.s32.totalorder %s17, 0
      %p82 = por %p80, %p81
      %s83 = ssub.s32 %s19, %s26
      %s84 = ssub.s32 %s18, %s30
      %s85 = sor.u32 %s83, %s84
      %p86 = scmp.eq.s32.totalorder %s85, 0
      %s88 = sadd.s32 %s87, 1
      %s89 = scalar_select %p86, %s87, %s88
      %p92 = pneg %p86
      %p93 = scmp.eq.s32.totalorder %s11, 1
      %p94 = por %p92, %p93
      %p95 = scmp.ne.s32.totalorder %s87, %s90
      %p96 = scmp.eq.s32.totalorder %s11, 0
      %p97 = por %p95, %p96
      %p98 = scmp.ne.s32.totalorder %s87, %s90
      %p99 = scmp.eq.s32.totalorder %s16, 1
      %p100 = por %p98, %p99
      %p101 = scmp.ne.s32.totalorder %s90, %s91
      %p102 = scmp.eq.s32.totalorder %s16, 0
      %p103 = por %p101, %p102
      %p104 = scmp.ne.s32.totalorder %s90, %s91
      %p105 = scmp.eq.s32.totalorder %s17, 1
      %p106 = por %p104, %p105
      %p108 = scmp.ne.s32.totalorder %s91, %s107
      %p109 = scmp.eq.s32.totalorder %s17, 0
      %p110 = por %p108, %p109
      %p111 = scmp.le.s32.totalorder 1, %s11
      %p112 = scmp.lt.s32.totalorder %s11, 3
      %p113 = pnand %p111, %p112
      %p114 = pneg %p113
      // Predicated region
      $region9: #{tpu_custom_call.1} parent=5 // pred_check
        _
      $region10: #{tpu_custom_call.1} parent=5 // pred_check_branch
        %116 = sbr.rel (%p113) target = $region12
      $region11: #{tpu_custom_call.1} parent=5 // pred_region
        %s117 = ssub.s32 %s11, 1
        // Predicated region
        $region13: #{tpu_custom_call.1} parent=11 // pred_check
          %p118 = pneg %p75
        $region14: #{tpu_custom_call.1} parent=11 // pred_check_branch
          %120 = sbr.rel (%p118) target = $region16
        $region15: #{tpu_custom_call.1} parent=11 // pred_region
          %s121 = smul.u32 2, %s20
          %p122 = scmp.lt.s32.totalorder %s121, 1
          %s123 = scalar_select %p122, %s121, 1
          %s124 = smul.addr %s123, 8
          %s125 = scalar_lea.vmem %s1, %s124
          %s126 = smul.u32 2, %s20
        $region16: #{tpu_custom_call.1} parent=11 // pred_fallthru
          _
      $region12: #{tpu_custom_call.1} parent=5 // pred_fallthru
        _
      %p127 = scmp.lt.s32.totalorder %s11, 2
      // Predicated region
      $region17: #{tpu_custom_call.1} parent=5 // pred_check
        %p128 = pneg %p127
      $region18: #{tpu_custom_call.1} parent=5 // pred_check_branch
        %130 = sbr.rel (%p128) target = $region20
      $region19: #{tpu_custom_call.1} parent=5 // pred_region
        // Predicated region
        $region21: #{tpu_custom_call.1} parent=19 // pred_check
          %p131 = pneg %p43
        $region22: #{tpu_custom_call.1} parent=19 // pred_check_branch
          %133 = sbr.rel (%p131) target = $region24
        $region23: #{tpu_custom_call.1} parent=19 // pred_region
          %p134 = scmp.lt.s32.totalorder %s19, 1
          %s135 = scalar_select %p134, %s19, 1
          %s136 = smul.addr %s135, 32
          %s137 = smul.addr %s136, 8
          %s138 = scalar_lea.vmem %s0, %s137
        $region24: #{tpu_custom_call.1} parent=19 // pred_fallthru
          _
      $region20: #{tpu_custom_call.1} parent=5 // pred_fallthru
        _
      %p139 = scmp.le.s32.totalorder 1, %s11
      %p140 = scmp.lt.s32.totalorder %s11, 3
      %p141 = pnand %p139, %p140
      %p142 = pneg %p141
      // Predicated region
      $region25: #{tpu_custom_call.1} parent=5 // pred_check
        _
      $region26: #{tpu_custom_call.1} parent=5 // pred_check_branch
        %144 = sbr.rel (%p141) target = $region28
      $region27: #{tpu_custom_call.1} parent=5 // pred_region
        %s145 = ssub.s32 %s11, 1
        %p146 = scmp.lt.s32.totalorder %s21, 1
        %s147 = scalar_select %p146, %s21, 1
        %s148 = smul.addr %s147, 32
        %s149 = smul.addr %s148, 8
        %s150 = scalar_lea.vmem %s0, %s149
        %p151 = pneg %p49
        %p152 = pneg %p46
        %s153 = smul.u32 2, %s20
        %p154 = scmp.lt.s32.totalorder %s153, 1
        %s155 = scalar_select %p154, %s153, 1
        %s156 = smul.addr %s155, 8
        %s157 = scalar_lea.vmem %s1, %s156
        %p158 = pneg %p75
        %p159 = pneg %p72
        %p160 = pneg %p103
        %p161 = pneg %p100
        %s162 = sand.u32 %s90, 1
        %s163 = scalar_lea.sflag [#allocation3], %s162
        %s164 = sand.u32 %s90, 1
        %s165 = smul.addr %s164, 512
        %s166 = scalar_lea.vmem [#allocation2], %s165
        %p167 = scmp.lt.s32.totalorder %s21, 1
        %s168 = scalar_select %p167, %s21, 1
        %s169 = smul.addr %s168, 32
        %s170 = smul.addr %s169, 8
        %s171 = scalar_lea.vmem %s0, %s170
        %s172 = smul.u32 2, %s20
        %p173 = scmp.lt.s32.totalorder %s172, 1
        %s174 = scalar_select %p173, %s172, 1
        %s175 = smul.addr %s174, 8
        %s176 = scalar_lea.vmem %s1, %s175
        %s177 = smul.u32 2, %s20
        %s178 = smul.u32 2, %s20
        %v179 = vld [vmem:[%s171] sm:$0xff]
        %v180 = vld [vmem:[%s171 + $0x8] sm:$0xff]
        %v181 = vld [vmem:[%s171 + $0x10] sm:$0xff]
        %v182 = vld [vmem:[%s171 + $0x18] sm:$0xff]
        %v183 = vld [vmem:[%s171 + $0x20] sm:$0xff]
        %v184 = vld [vmem:[%s171 + $0x28] sm:$0xff]
        %v185 = vld [vmem:[%s171 + $0x30] sm:$0xff]
        %v186 = vld [vmem:[%s171 + $0x38] sm:$0xff]
        %v187 = vld [vmem:[%s171 + $0x40] sm:$0xff]
        %v188 = vld [vmem:[%s171 + $0x48] sm:$0xff]
        %v189 = vld [vmem:[%s171 + $0x50] sm:$0xff]
        %v190 = vld [vmem:[%s171 + $0x58] sm:$0xff]
        %v191 = vld [vmem:[%s171 + $0x60] sm:$0xff]
        %v192 = vld [vmem:[%s171 + $0x68] sm:$0xff]
        %v193 = vld [vmem:[%s171 + $0x70] sm:$0xff]
        %v194 = vld [vmem:[%s171 + $0x78] sm:$0xff]
        %v195 = vld [vmem:[%s171 + $0x80] sm:$0xff]
        %v196 = vld [vmem:[%s171 + $0x88] sm:$0xff]
        %v197 = vld [vmem:[%s171 + $0x90] sm:$0xff]
        %v198 = vld [vmem:[%s171 + $0x98] sm:$0xff]
        %v199 = vld [vmem:[%s171 + $0xa0] sm:$0xff]
        %v200 = vld [vmem:[%s171 + $0xa8] sm:$0xff]
        %v201 = vld [vmem:[%s171 + $0xb0] sm:$0xff]
        %v202 = vld [vmem:[%s171 + $0xb8] sm:$0xff]
        %v203 = vld [vmem:[%s171 + $0xc0] sm:$0xff]
        %v204 = vld [vmem:[%s171 + $0xc8] sm:$0xff]
        %v205 = vld [vmem:[%s171 + $0xd0] sm:$0xff]
        %v206 = vld [vmem:[%s171 + $0xd8] sm:$0xff]
        %v207 = vld [vmem:[%s171 + $0xe0] sm:$0xff]
        %v208 = vld [vmem:[%s171 + $0xe8] sm:$0xff]
        %v209 = vld [vmem:[%s171 + $0xf0] sm:$0xff]
        %v210 = vld [vmem:[%s171 + $0xf8] sm:$0xff]
        %v211 = vmul.f32 %v179, %v179
        %v212 = vmul.f32 %v180, %v180
        %v213 = vmul.f32 %v181, %v181
        %v214 = vmul.f32 %v182, %v182
        %v215 = vmul.f32 %v183, %v183
        %v216 = vmul.f32 %v184, %v184
        %v217 = vmul.f32 %v185, %v185
        %v218 = vmul.f32 %v186, %v186
        %v219 = vmul.f32 %v187, %v187
        %v220 = vmul.f32 %v188, %v188
        %v221 = vmul.f32 %v189, %v189
        %v222 = vmul.f32 %v190, %v190
        %v223 = vmul.f32 %v191, %v191
        %v224 = vmul.f32 %v192, %v192
        %v225 = vmul.f32 %v193, %v193
        %v226 = vmul.f32 %v194, %v194
        %v227 = vmul.f32 %v195, %v195
        %v228 = vmul.f32 %v196, %v196
        %v229 = vmul.f32 %v197, %v197
        %v230 = vmul.f32 %v198, %v198
        %v231 = vmul.f32 %v199, %v199
        %v232 = vmul.f32 %v200, %v200
        %v233 = vmul.f32 %v201, %v201
        %v234 = vmul.f32 %v202, %v202
        %v235 = vmul.f32 %v203, %v203
        %v236 = vmul.f32 %v204, %v204
        %v237 = vmul.f32 %v205, %v205
        %v238 = vmul.f32 %v206, %v206
        %v239 = vmul.f32 %v207, %v207
        %v240 = vmul.f32 %v208, %v208
        %v241 = vmul.f32 %v209, %v209
        %v242 = vmul.f32 %v210, %v210
        %vm243 = vcmask 261120
        %v244 = vsel %vm243, %v211, 0.0
        %245 = vadd.xlane.f32.xlu0 %v244
        %v246 = vpop.xlane.xlu0 %245
        %v247 = vsel %vm243, %v212, 0.0
        %248 = vadd.xlane.f32.xlu0 %v247
        %v249 = vpop.xlane.xlu0 %248
        %v250 = vsel %vm243, %v213, 0.0
        %251 = vadd.xlane.f32.xlu0 %v250
        %v252 = vpop.xlane.xlu0 %251
        %v253 = vsel %vm243, %v214, 0.0
        %254 = vadd.xlane.f32.xlu0 %v253
        %v255 = vpop.xlane.xlu0 %254
        %v256 = vsel %vm243, %v215, 0.0
        %257 = vadd.xlane.f32.xlu0 %v256
        %v258 = vpop.xlane.xlu0 %257
        %v259 = vsel %vm243, %v216, 0.0
        %260 = vadd.xlane.f32.xlu0 %v259
        %v261 = vpop.xlane.xlu0 %260
        %v262 = vsel %vm243, %v217, 0.0
        %263 = vadd.xlane.f32.xlu0 %v262
        %v264 = vpop.xlane.xlu0 %263
        %v265 = vsel %vm243, %v218, 0.0
        %266 = vadd.xlane.f32.xlu0 %v265
        %v267 = vpop.xlane.xlu0 %266
        %v268 = vsel %vm243, %v219, 0.0
        %269 = vadd.xlane.f32.xlu0 %v268
        %v270 = vpop.xlane.xlu0 %269
        %v271 = vsel %vm243, %v220, 0.0
        %272 = vadd.xlane.f32.xlu0 %v271
        %v273 = vpop.xlane.xlu0 %272
        %v274 = vsel %vm243, %v221, 0.0
        %275 = vadd.xlane.f32.xlu0 %v274
        %v276 = vpop.xlane.xlu0 %275
        %v277 = vsel %vm243, %v222, 0.0
        %278 = vadd.xlane.f32.xlu0 %v277
        %v279 = vpop.xlane.xlu0 %278
        %v280 = vsel %vm243, %v223, 0.0
        %281 = vadd.xlane.f32.xlu0 %v280
        %v282 = vpop.xlane.xlu0 %281
        %v283 = vsel %vm243, %v224, 0.0
        %284 = vadd.xlane.f32.xlu0 %v283
        %v285 = vpop.xlane.xlu0 %284
        %v286 = vsel %vm243, %v225, 0.0
        %287 = vadd.xlane.f32.xlu0 %v286
        %v288 = vpop.xlane.xlu0 %287
        %v289 = vsel %vm243, %v226, 0.0
        %290 = vadd.xlane.f32.xlu0 %v289
        %v291 = vpop.xlane.xlu0 %290
        %v292 = vsel %vm243, %v227, 0.0
        %293 = vadd.xlane.f32.xlu0 %v292
        %v294 = vpop.xlane.xlu0 %293
        %v295 = vsel %vm243, %v228, 0.0
        %296 = vadd.xlane.f32.xlu0 %v295
        %v297 = vpop.xlane.xlu0 %296
        %v298 = vsel %vm243, %v229, 0.0
        %299 = vadd.xlane.f32.xlu0 %v298
        %v300 = vpop.xlane.xlu0 %299
        %v301 = vsel %vm243, %v230, 0.0
        %302 = vadd.xlane.f32.xlu0 %v301
        %v303 = vpop.xlane.xlu0 %302
        %v304 = vsel %vm243, %v231, 0.0
        %305 = vadd.xlane.f32.xlu0 %v304
        %v306 = vpop.xlane.xlu0 %305
        %v307 = vsel %vm243, %v232, 0.0
        %308 = vadd.xlane.f32.xlu0 %v307
        %v309 = vpop.xlane.xlu0 %308
        %v310 = vsel %vm243, %v233, 0.0
        %311 = vadd.xlane.f32.xlu0 %v310
        %v312 = vpop.xlane.xlu0 %311
        %v313 = vsel %vm243, %v234, 0.0
        %314 = vadd.xlane.f32.xlu0 %v313
        %v315 = vpop.xlane.xlu0 %314
        %v316 = vsel %vm243, %v235, 0.0
        %317 = vadd.xlane.f32.xlu0 %v316
        %v318 = vpop.xlane.xlu0 %317
        %v319 = vsel %vm243, %v236, 0.0
        %320 = vadd.xlane.f32.xlu0 %v319
        %v321 = vpop.xlane.xlu0 %320
        %v322 = vsel %vm243, %v237, 0.0
        %323 = vadd.xlane.f32.xlu0 %v322
        %v324 = vpop.xlane.xlu0 %323
        %v325 = vsel %vm243, %v238, 0.0
        %326 = vadd.xlane.f32.xlu0 %v325
        %v327 = vpop.xlane.xlu0 %326
        %v328 = vsel %vm243, %v239, 0.0
        %329 = vadd.xlane.f32.xlu0 %v328
        %v330 = vpop.xlane.xlu0 %329
        %v331 = vsel %vm243, %v240, 0.0
        %332 = vadd.xlane.f32.xlu0 %v331
        %v333 = vpop.xlane.xlu0 %332
        %v334 = vsel %vm243, %v241, 0.0
        %335 = vadd.xlane.f32.xlu0 %v334
        %v336 = vpop.xlane.xlu0 %335
        %v337 = vsel %vm243, %v242, 0.0
        %338 = vadd.xlane.f32.xlu0 %v337
        %v339 = vpop.xlane.xlu0 %338
        %v340 = vmax.f32 %v246, 1e-24
        %v341 = vmax.f32 %v249, 1e-24
        %v342 = vmax.f32 %v252, 1e-24
        %v343 = vmax.f32 %v255, 1e-24
        %v344 = vmax.f32 %v258, 1e-24
        %v345 = vmax.f32 %v261, 1e-24
        %v346 = vmax.f32 %v264, 1e-24
        %v347 = vmax.f32 %v267, 1e-24
        %v348 = vmax.f32 %v270, 1e-24
        %v349 = vmax.f32 %v273, 1e-24
        %v350 = vmax.f32 %v276, 1e-24
        %v351 = vmax.f32 %v279, 1e-24
        %v352 = vmax.f32 %v282, 1e-24
        %v353 = vmax.f32 %v285, 1e-24
        %v354 = vmax.f32 %v288, 1e-24
        %v355 = vmax.f32 %v291, 1e-24
        %v356 = vmax.f32 %v294, 1e-24
        %v357 = vmax.f32 %v297, 1e-24
        %v358 = vmax.f32 %v300, 1e-24
        %v359 = vmax.f32 %v303, 1e-24
        %v360 = vmax.f32 %v306, 1e-24
        %v361 = vmax.f32 %v309, 1e-24
        %v362 = vmax.f32 %v312, 1e-24
        %v363 = vmax.f32 %v315, 1e-24
        %v364 = vmax.f32 %v318, 1e-24
        %v365 = vmax.f32 %v321, 1e-24
        %v366 = vmax.f32 %v324, 1e-24
        %v367 = vmax.f32 %v327, 1e-24
        %v368 = vmax.f32 %v330, 1e-24
        %v369 = vmax.f32 %v333, 1e-24
        %v370 = vmax.f32 %v336, 1e-24
        %v371 = vmax.f32 %v339, 1e-24
        %v372 = vrsqrt.pop %v340
        %v373 = vrsqrt.pop %v341
        %v374 = vrsqrt.pop %v342
        %v375 = vrsqrt.pop %v343
        %v376 = vrsqrt.pop %v344
        %v377 = vrsqrt.pop %v345
        %v378 = vrsqrt.pop %v346
        %v379 = vrsqrt.pop %v347
        %v380 = vrsqrt.pop %v348
        %v381 = vrsqrt.pop %v349
        %v382 = vrsqrt.pop %v350
        %v383 = vrsqrt.pop %v351
        %v384 = vrsqrt.pop %v352
        %v385 = vrsqrt.pop %v353
        %v386 = vrsqrt.pop %v354
        %v387 = vrsqrt.pop %v355
        %v388 = vrsqrt.pop %v356
        %v389 = vrsqrt.pop %v357
        %v390 = vrsqrt.pop %v358
        %v391 = vrsqrt.pop %v359
        %v392 = vrsqrt.pop %v360
        %v393 = vrsqrt.pop %v361
        %v394 = vrsqrt.pop %v362
        %v395 = vrsqrt.pop %v363
        %v396 = vrsqrt.pop %v364
        %v397 = vrsqrt.pop %v365
        %v398 = vrsqrt.pop %v366
        %v399 = vrsqrt.pop %v367
        %v400 = vrsqrt.pop %v368
        %v401 = vrsqrt.pop %v369
        %v402 = vrsqrt.pop %v370
        %v403 = vrsqrt.pop %v371
        %v404 = vmul.f32 %v179, %v372
        %v405 = vmul.f32 %v180, %v373
        %v406 = vmul.f32 %v181, %v374
        %v407 = vmul.f32 %v182, %v375
        %v408 = vmul.f32 %v183, %v376
        %v409 = vmul.f32 %v184, %v377
        %v410 = vmul.f32 %v185, %v378
        %v411 = vmul.f32 %v186, %v379
        %v412 = vmul.f32 %v187, %v380
        %v413 = vmul.f32 %v188, %v381
        %v414 = vmul.f32 %v189, %v382
        %v415 = vmul.f32 %v190, %v383
        %v416 = vmul.f32 %v191, %v384
        %v417 = vmul.f32 %v192, %v385
        %v418 = vmul.f32 %v193, %v386
        %v419 = vmul.f32 %v194, %v387
        %v420 = vmul.f32 %v195, %v388
        %v421 = vmul.f32 %v196, %v389
        %v422 = vmul.f32 %v197, %v390
        %v423 = vmul.f32 %v198, %v391
        %v424 = vmul.f32 %v199, %v392
        %v425 = vmul.f32 %v200, %v393
        %v426 = vmul.f32 %v201, %v394
        %v427 = vmul.f32 %v202, %v395
        %v428 = vmul.f32 %v203, %v396
        %v429 = vmul.f32 %v204, %v397
        %v430 = vmul.f32 %v205, %v398
        %v431 = vmul.f32 %v206, %v399
        %v432 = vmul.f32 %v207, %v400
        %v433 = vmul.f32 %v208, %v401
        %v434 = vmul.f32 %v209, %v402
        %v435 = vmul.f32 %v210, %v403
        %v436 = vld [vmem:[%s176] sm:$0xff]
        %v437 = vld [vmem:[%s176 + $0x8] sm:$0xff]
        %v438 = vld [vmem:[%s176 + $0x10] sm:$0xff]
        %v439 = vld [vmem:[%s176 + $0x18] sm:$0xff]
        %v440 = vld [vmem:[%s176 + $0x20] sm:$0xff]
        %v441 = vld [vmem:[%s176 + $0x28] sm:$0xff]
        %v442 = vld [vmem:[%s176 + $0x30] sm:$0xff]
        %v443 = vld [vmem:[%s176 + $0x38] sm:$0xff]
        %v444 = vld [vmem:[%s176 + $0x40] sm:$0xff]
        %v445 = vld [vmem:[%s176 + $0x48] sm:$0xff]
        %v446 = vld [vmem:[%s176 + $0x50] sm:$0xff]
        %v447 = vld [vmem:[%s176 + $0x58] sm:$0xff]
        %v448 = vld [vmem:[%s176 + $0x60] sm:$0xff]
        %v449 = vld [vmem:[%s176 + $0x68] sm:$0xff]
        %v450 = vld [vmem:[%s176 + $0x70] sm:$0xff]
        %v451 = vld [vmem:[%s176 + $0x78] sm:$0xff]
        %v452 = vld [vmem:[%s176 + $0x80] sm:$0xff]
        %v453 = vld [vmem:[%s176 + $0x88] sm:$0xff]
        %v454 = vld [vmem:[%s176 + $0x90] sm:$0xff]
        %v455 = vld [vmem:[%s176 + $0x98] sm:$0xff]
        %v456 = vld [vmem:[%s176 + $0xa0] sm:$0xff]
        %v457 = vld [vmem:[%s176 + $0xa8] sm:$0xff]
        %v458 = vld [vmem:[%s176 + $0xb0] sm:$0xff]
        %v459 = vld [vmem:[%s176 + $0xb8] sm:$0xff]
        %v460 = vld [vmem:[%s176 + $0xc0] sm:$0xff]
        %v461 = vld [vmem:[%s176 + $0xc8] sm:$0xff]
        %v462 = vld [vmem:[%s176 + $0xd0] sm:$0xff]
        %v463 = vld [vmem:[%s176 + $0xd8] sm:$0xff]
        %v464 = vld [vmem:[%s176 + $0xe0] sm:$0xff]
        %v465 = vld [vmem:[%s176 + $0xe8] sm:$0xff]
        %v466 = vld [vmem:[%s176 + $0xf0] sm:$0xff]
        %v467 = vld [vmem:[%s176 + $0xf8] sm:$0xff]
        %v468 = vld [vmem:[%s176 + $0x100] sm:$0xff]
        %v469 = vld [vmem:[%s176 + $0x108] sm:$0xff]
        %v470 = vld [vmem:[%s176 + $0x110] sm:$0xff]
        %v471 = vld [vmem:[%s176 + $0x118] sm:$0xff]
        %v472 = vld [vmem:[%s176 + $0x120] sm:$0xff]
        %v473 = vld [vmem:[%s176 + $0x128] sm:$0xff]
        %v474 = vld [vmem:[%s176 + $0x130] sm:$0xff]
        %v475 = vld [vmem:[%s176 + $0x138] sm:$0xff]
        %v476 = vld [vmem:[%s176 + $0x140] sm:$0xff]
        %v477 = vld [vmem:[%s176 + $0x148] sm:$0xff]
        %v478 = vld [vmem:[%s176 + $0x150] sm:$0xff]
        %v479 = vld [vmem:[%s176 + $0x158] sm:$0xff]
        %v480 = vld [vmem:[%s176 + $0x160] sm:$0xff]
        %v481 = vld [vmem:[%s176 + $0x168] sm:$0xff]
        %v482 = vld [vmem:[%s176 + $0x170] sm:$0xff]
        %v483 = vld [vmem:[%s176 + $0x178] sm:$0xff]
        %v484 = vld [vmem:[%s176 + $0x180] sm:$0xff]
        %v485 = vld [vmem:[%s176 + $0x188] sm:$0xff]
        %v486 = vld [vmem:[%s176 + $0x190] sm:$0xff]
        %v487 = vld [vmem:[%s176 + $0x198] sm:$0xff]
        %v488 = vld [vmem:[%s176 + $0x1a0] sm:$0xff]
        %v489 = vld [vmem:[%s176 + $0x1a8] sm:$0xff]
        %v490 = vld [vmem:[%s176 + $0x1b0] sm:$0xff]
        %v491 = vld [vmem:[%s176 + $0x1b8] sm:$0xff]
        %v492 = vld [vmem:[%s176 + $0x1c0] sm:$0xff]
        %v493 = vld [vmem:[%s176 + $0x1c8] sm:$0xff]
        %v494 = vld [vmem:[%s176 + $0x1d0] sm:$0xff]
        %v495 = vld [vmem:[%s176 + $0x1d8] sm:$0xff]
        %v496 = vld [vmem:[%s176 + $0x1e0] sm:$0xff]
        %v497 = vld [vmem:[%s176 + $0x1e8] sm:$0xff]
        %v498 = vld [vmem:[%s176 + $0x1f0] sm:$0xff]
        %v499 = vld [vmem:[%s176 + $0x1f8] sm:$0xff]
        %500 = vxpose.xlu0.b32.start [1/16] %v404, 128
        %501 = vxpose.xlu0.b32.cont [2/16] %v405, 128
        %502 = vxpose.xlu0.b32.cont [3/16] %v406, 128
        %503 = vxpose.xlu0.b32.cont [4/16] %v407, 128
        %504 = vxpose.xlu0.b32.cont [5/16] %v408, 128
        %505 = vxpose.xlu0.b32.cont [6/16] %v409, 128
        %506 = vxpose.xlu0.b32.cont [7/16] %v410, 128
        %507 = vxpose.xlu0.b32.cont [8/16] %v411, 128
        %508 = vxpose.xlu0.b32.cont [9/16] %v412, 128
        %509 = vxpose.xlu0.b32.cont [10/16] %v413, 128
        %510 = vxpose.xlu0.b32.cont [11/16] %v414, 128
        %511 = vxpose.xlu0.b32.cont [12/16] %v415, 128
        %512 = vxpose.xlu0.b32.cont [13/16] %v416, 128
        %513 = vxpose.xlu0.b32.cont [14/16] %v417, 128
        %514 = vxpose.xlu0.b32.cont [15/16] %v418, 128
        %515 = vxpose.xlu0.b32.end [16/16] %v419, 128
        %v516 = vpop.trf.xlu0
        %v517 = vpop.trf.xlu0
        %v518 = vpop.trf.xlu0
        %v519 = vpop.trf.xlu0
        %v520 = vpop.trf.xlu0
        %v521 = vpop.trf.xlu0
        %v522 = vpop.trf.xlu0
        %v523 = vpop.trf.xlu0
        %v524 = vpop.trf.xlu0
        %v525 = vpop.trf.xlu0
        %v526 = vpop.trf.xlu0
        %v527 = vpop.trf.xlu0
        %v528 = vpop.trf.xlu0
        %v529 = vpop.trf.xlu0
        %v530 = vpop.trf.xlu0
        %v531 = vpop.trf.xlu0
        %532 = vxpose.xlu0.b32.start [1/16] %v420, 128
        %533 = vxpose.xlu0.b32.cont [2/16] %v421, 128
        %534 = vxpose.xlu0.b32.cont [3/16] %v422, 128
        %535 = vxpose.xlu0.b32.cont [4/16] %v423, 128
        %536 = vxpose.xlu0.b32.cont [5/16] %v424, 128
        %537 = vxpose.xlu0.b32.cont [6/16] %v425, 128
        %538 = vxpose.xlu0.b32.cont [7/16] %v426, 128
        %539 = vxpose.xlu0.b32.cont [8/16] %v427, 128
        %540 = vxpose.xlu0.b32.cont [9/16] %v428, 128
        %541 = vxpose.xlu0.b32.cont [10/16] %v429, 128
        %542 = vxpose.xlu0.b32.cont [11/16] %v430, 128
        %543 = vxpose.xlu0.b32.cont [12/16] %v431, 128
        %544 = vxpose.xlu0.b32.cont [13/16] %v432, 128
        %545 = vxpose.xlu0.b32.cont [14/16] %v433, 128
        %546 = vxpose.xlu0.b32.cont [15/16] %v434, 128
        %547 = vxpose.xlu0.b32.end [16/16] %v435, 128
        %v548 = vpop.trf.xlu0
        %v549 = vpop.trf.xlu0
        %v550 = vpop.trf.xlu0
        %v551 = vpop.trf.xlu0
        %v552 = vpop.trf.xlu0
        %v553 = vpop.trf.xlu0
        %v554 = vpop.trf.xlu0
        %v555 = vpop.trf.xlu0
        %v556 = vpop.trf.xlu0
        %v557 = vpop.trf.xlu0
        %v558 = vpop.trf.xlu0
        %v559 = vpop.trf.xlu0
        %v560 = vpop.trf.xlu0
        %v561 = vpop.trf.xlu0
        %v562 = vpop.trf.xlu0
        %v563 = vpop.trf.xlu0
        %564 = vmatprep.subr.mxu0 %v437
        %565 = vmatpush1.msra.mxu0 %v436
        %566 = vmatprep.subr.mxu0 %v439
        %567 = vmatpush1.msra.mxu0 %v438
        %568 = vmatprep.subr.mxu0 %v441
        %569 = vmatpush1.msra.mxu0 %v440
        %570 = vmatprep.subr.mxu0 %v443
        %571 = vmatpush1.msra.mxu0 %v442
        %572 = vmatprep.subr.mxu0 %v445
        %573 = vmatpush1.msra.mxu0 %v444
        %574 = vmatprep.subr.mxu0 %v447
        %575 = vmatpush1.msra.mxu0 %v446
        %576 = vmatprep.subr.mxu0 %v449
        %577 = vmatpush1.msra.mxu0 %v448
        %578 = vmatprep.subr.mxu0 %v451
        %579 = vmatpush1.msra.mxu0 %v450
        %580 = vmatprep.subr.mxu0 %v453
        %581 = vmatpush1.msra.mxu0 %v452
        %582 = vmatprep.subr.mxu0 %v455
        %583 = vmatpush1.msra.mxu0 %v454
        %584 = vmatprep.subr.mxu0 %v457
        %585 = vmatpush1.msra.mxu0 %v456
        %586 = vmatprep.subr.mxu0 %v459
        %587 = vmatpush1.msra.mxu0 %v458
        %588 = vmatprep.subr.mxu0 %v461
        %589 = vmatpush1.msra.mxu0 %v460
        %590 = vmatprep.subr.mxu0 %v463
        %591 = vmatpush1.msra.mxu0 %v462
        %592 = vmatprep.subr.mxu0 %v465
        %593 = vmatpush1.msra.mxu0 %v464
        %594 = vmatprep.subr.mxu0 %v467
        %595 = vmatpush1.msra.mxu0 %v466
        %596 = vmatprep.subr.mxu0 %v469
        %597 = vmatpush1.msra.mxu0 %v468
        %598 = vmatprep.subr.mxu0 %v471
        %599 = vmatpush1.msra.mxu0 %v470
        %600 = vmatprep.subr.mxu0 %v473
        %601 = vmatpush1.msra.mxu0 %v472
        %602 = vmatprep.subr.mxu0 %v475
        %603 = vmatpush1.msra.mxu0 %v474
        %604 = vmatprep.subr.mxu0 %v477
        %605 = vmatpush1.msra.mxu0 %v476
        %606 = vmatprep.subr.mxu0 %v479
        %607 = vmatpush1.msra.mxu0 %v478
        %608 = vmatprep.subr.mxu0 %v481
        %609 = vmatpush1.msra.mxu0 %v480
        %610 = vmatprep.subr.mxu0 %v483
        %611 = vmatpush1.msra.mxu0 %v482
        %612 = vmatprep.subr.mxu0 %v485
        %613 = vmatpush1.msra.mxu0 %v484
        %614 = vmatprep.subr.mxu0 %v487
        %615 = vmatpush1.msra.mxu0 %v486
        %616 = vmatprep.subr.mxu0 %v489
        %617 = vmatpush1.msra.mxu0 %v488
        %618 = vmatprep.subr.mxu0 %v491
        %619 = vmatpush1.msra.mxu0 %v490
        %620 = vmatprep.subr.mxu0 %v493
        %621 = vmatpush1.msra.mxu0 %v492
        %622 = vmatprep.subr.mxu0 %v495
        %623 = vmatpush1.msra.mxu0 %v494
        %624 = vmatprep.subr.mxu0 %v497
        %625 = vmatpush1.msra.mxu0 %v496
        %626 = vmatprep.subr.mxu0 %v499
        %627 = vmatpush1.msra.mxu0 %v498
        %628 = vmatprep.mubr.f32.mxu0 %v548
        %629 = vmatmul.mubr.f32.gmra.mrb[0].mxu0 %v516
        %v630 = vpop.f32.mrb[0].mxu0
        %v631 = vadd.f32 0.0, %v630
        %v632 = vpop.f32.mrb[0].mxu0
        %v633 = vadd.f32 0.0, %v632
        %634 = vmatprep.mubr.f32.mxu0 %v549
        %635 = vmatmul.mubr.f32.gmra.mrb[0].mxu0 %v517
        %v636 = vpop.f32.mrb[0].mxu0
        %v637 = vadd.f32 0.0, %v636
        %v638 = vpop.f32.mrb[0].mxu0
        %v639 = vadd.f32 0.0, %v638
        %640 = vmatprep.mubr.f32.mxu0 %v550
        %641 = vmatmul.mubr.f32.gmra.mrb[0].mxu0 %v518
        %v642 = vpop.f32.mrb[0].mxu0
        %v643 = vadd.f32 0.0, %v642
        %v644 = vpop.f32.mrb[0].mxu0
        %v645 = vadd.f32 0.0, %v644
        %646 = vmatprep.mubr.f32.mxu0 %v551
        %647 = vmatmul.mubr.f32.gmra.mrb[0].mxu0 %v519
        %v648 = vpop.f32.mrb[0].mxu0
        %v649 = vadd.f32 0.0, %v648
        %v650 = vpop.f32.mrb[0].mxu0
        %v651 = vadd.f32 0.0, %v650
        %652 = vdwg.mxu0
        %v654 = vsel %vm243, %v404, 0
        %v657 = vsel %vm243, %v405, 0
        %v660 = vsel %vm243, %v406, 0
        %v663 = vsel %vm243, %v407, 0
        %v666 = vsel %vm243, %v408, 0
        %v669 = vsel %vm243, %v409, 0
        %v672 = vsel %vm243, %v410, 0
        %v675 = vsel %vm243, %v411, 0
        %v678 = vsel %vm243, %v412, 0
        %v681 = vsel %vm243, %v413, 0
        %v684 = vsel %vm243, %v414, 0
        %v687 = vsel %vm243, %v415, 0
        %v690 = vsel %vm243, %v416, 0
        %v693 = vsel %vm243, %v417, 0
        %v696 = vsel %vm243, %v418, 0
        %v699 = vsel %vm243, %v419, 0
        %v702 = vsel %vm243, %v420, 0
        %v705 = vsel %vm243, %v421, 0
        %v708 = vsel %vm243, %v422, 0
        %v711 = vsel %vm243, %v423, 0
        %v714 = vsel %vm243, %v424, 0
        %v717 = vsel %vm243, %v425, 0
        %v720 = vsel %vm243, %v426, 0
        %v723 = vsel %vm243, %v427, 0
        %v726 = vsel %vm243, %v428, 0
        %v729 = vsel %vm243, %v429, 0
        %v732 = vsel %vm243, %v430, 0
        %v735 = vsel %vm243, %v431, 0
        %v738 = vsel %vm243, %v432, 0
        %v741 = vsel %vm243, %v433, 0
        %v744 = vsel %vm243, %v434, 0
        %v747 = vsel %vm243, %v435, 0
        %749 = vmatprep.subr.mxu0 %v633
        %750 = vmatpush1.msra.mxu0 %v631
        %751 = vmatprep.subr.mxu0 %v639
        %752 = vmatpush1.msra.mxu0 %v637
        %753 = vmatprep.subr.mxu0 %v645
        %754 = vmatpush1.msra.mxu0 %v643
        %755 = vmatprep.subr.mxu0 %v651
        %756 = vmatpush1.msra.mxu0 %v649
        %757 = vmatprep.subr.mxu0 0.0
        %758 = vmatpush1.msra.mxu0 0.0
        %759 = vmatprep.subr.mxu0 0.0
        %760 = vmatpush1.msra.mxu0 0.0
        %761 = vmatprep.subr.mxu0 0.0
        %762 = vmatpush1.msra.mxu0 0.0
        %763 = vmatprep.subr.mxu0 0.0
        %764 = vmatpush1.msra.mxu0 0.0
        %765 = vmatprep.subr.mxu0 0.0
        %766 = vmatpush1.msra.mxu0 0.0
        %767 = vmatprep.subr.mxu0 0.0
        %768 = vmatpush1.msra.mxu0 0.0
        %769 = vmatprep.subr.mxu0 0.0
        %770 = vmatpush1.msra.mxu0 0.0
        %771 = vmatprep.subr.mxu0 0.0
        %772 = vmatpush1.msra.mxu0 0.0
        %773 = vmatprep.subr.mxu0 0.0
        %774 = vmatpush1.msra.mxu0 0.0
        %775 = vmatprep.subr.mxu0 0.0
        %776 = vmatpush1.msra.mxu0 0.0
        %777 = vmatprep.subr.mxu0 0.0
        %778 = vmatpush1.msra.mxu0 0.0
        %779 = vmatprep.subr.mxu0 0.0
        %780 = vmatpush1.msra.mxu0 0.0
        %781 = vmatprep.subr.mxu0 0.0
        %782 = vmatpush1.msra.mxu0 0.0
        %783 = vmatprep.subr.mxu0 0.0
        %784 = vmatpush1.msra.mxu0 0.0
        %785 = vmatprep.subr.mxu0 0.0
        %786 = vmatpush1.msra.mxu0 0.0
        %787 = vmatprep.subr.mxu0 0.0
        %788 = vmatpush1.msra.mxu0 0.0
        %789 = vmatprep.subr.mxu0 0.0
        %790 = vmatpush1.msra.mxu0 0.0
        %791 = vmatprep.subr.mxu0 0.0
        %792 = vmatpush1.msra.mxu0 0.0
        %793 = vmatprep.subr.mxu0 0.0
        %794 = vmatpush1.msra.mxu0 0.0
        %795 = vmatprep.subr.mxu0 0.0
        %796 = vmatpush1.msra.mxu0 0.0
        %797 = vmatprep.subr.mxu0 0.0
        %798 = vmatpush1.msra.mxu0 0.0
        %799 = vmatprep.subr.mxu0 0.0
        %800 = vmatpush1.msra.mxu0 0.0
        %801 = vmatprep.subr.mxu0 0.0
        %802 = vmatpush1.msra.mxu0 0.0
        %803 = vmatprep.subr.mxu0 0.0
        %804 = vmatpush1.msra.mxu0 0.0
        %805 = vmatprep.subr.mxu0 0.0
        %806 = vmatpush1.msra.mxu0 0.0
        %807 = vmatprep.subr.mxu0 0.0
        %808 = vmatpush1.msra.mxu0 0.0
        %809 = vmatprep.subr.mxu0 0.0
        %810 = vmatpush1.msra.mxu0 0.0
        %811 = vmatprep.subr.mxu0 0.0
        %812 = vmatpush1.msra.mxu0 0.0
        %813 = vmatprep.mubr.f32.mxu0 0.0
        %814 = vmatmul.mubr.f32.gmra.mrb[0].mxu0 %v654
        %v815 = vpop.f32.mrb[0].mxu0
        %v816 = vadd.f32 0.0, %v815
        %v817 = vpop.f32.mrb[0].mxu0
        %v818 = vadd.f32 0.0, %v817
        %819 = vmatprep.mubr.f32.mxu0 0.0
        %820 = vmatmul.mubr.f32.gmra.mrb[0].mxu0 %v657
        %v821 = vpop.f32.mrb[0].mxu0
        %v822 = vadd.f32 0.0, %v821
        %v823 = vpop.f32.mrb[0].mxu0
        %v824 = vadd.f32 0.0, %v823
        %825 = vmatprep.mubr.f32.mxu0 0.0
        %826 = vmatmul.mubr.f32.gmra.mrb[0].mxu0 %v660
        %v827 = vpop.f32.mrb[0].mxu0
        %v828 = vadd.f32 0.0, %v827
        %v829 = vpop.f32.mrb[0].mxu0
        %v830 = vadd.f32 0.0, %v829
        %831 = vmatprep.mubr.f32.mxu0 0.0
        %832 = vmatmul.mubr.f32.gmra.mrb[0].mxu0 %v663
        %v833 = vpop.f32.mrb[0].mxu0
        %v834 = vadd.f32 0.0, %v833
        %v835 = vpop.f32.mrb[0].mxu0
        %v836 = vadd.f32 0.0, %v835
        %837 = vmatprep.mubr.f32.mxu0 0.0
        %838 = vmatmul.mubr.f32.gmra.mrb[0].mxu0 %v666
        %v839 = vpop.f32.mrb[0].mxu0
        %v840 = vadd.f32 0.0, %v839
        %v841 = vpop.f32.mrb[0].mxu0
        %v842 = vadd.f32 0.0, %v841
        %843 = vmatprep.mubr.f32.mxu0 0.0
        %844 = vmatmul.mubr.f32.gmra.mrb[0].mxu0 %v669
        %v845 = vpop.f32.mrb[0].mxu0
        %v846 = vadd.f32 0.0, %v845
        %v847 = vpop.f32.mrb[0].mxu0
        %v848 = vadd.f32 0.0, %v847
        %849 = vmatprep.mubr.f32.mxu0 0.0
        %850 = vmatmul.mubr.f32.gmra.mrb[0].mxu0 %v672
        %v851 = vpop.f32.mrb[0].mxu0
        %v852 = vadd.f32 0.0, %v851
        %v853 = vpop.f32.mrb[0].mxu0
        %v854 = vadd.f32 0.0, %v853
        %855 = vmatprep.mubr.f32.mxu0 0.0
        %856 = vmatmul.mubr.f32.gmra.mrb[0].mxu0 %v675
        %v857 = vpop.f32.mrb[0].mxu0
        %v858 = vadd.f32 0.0, %v857
        %v859 = vpop.f32.mrb[0].mxu0
        %v860 = vadd.f32 0.0, %v859
        %861 = vmatprep.mubr.f32.mxu0 0.0
        %862 = vmatmul.mubr.f32.gmra.mrb[0].mxu0 %v678
        %v863 = vpop.f32.mrb[0].mxu0
        %v864 = vadd.f32 0.0, %v863
        %v865 = vpop.f32.mrb[0].mxu0
        %v866 = vadd.f32 0.0, %v865
        %867 = vmatprep.mubr.f32.mxu0 0.0
        %868 = vmatmul.mubr.f32.gmra.mrb[0].mxu0 %v681
        %v869 = vpop.f32.mrb[0].mxu0
        %v870 = vadd.f32 0.0, %v869
        %v871 = vpop.f32.mrb[0].mxu0
        %v872 = vadd.f32 0.0, %v871
        %873 = vmatprep.mubr.f32.mxu0 0.0
        %874 = vmatmul.mubr.f32.gmra.mrb[0].mxu0 %v684
        %v875 = vpop.f32.mrb[0].mxu0
        %v876 = vadd.f32 0.0, %v875
        %v877 = vpop.f32.mrb[0].mxu0
        %v878 = vadd.f32 0.0, %v877
        %879 = vmatprep.mubr.f32.mxu0 0.0
        %880 = vmatmul.mubr.f32.gmra.mrb[0].mxu0 %v687
        %v881 = vpop.f32.mrb[0].mxu0
        %v882 = vadd.f32 0.0, %v881
        %v883 = vpop.f32.mrb[0].mxu0
        %v884 = vadd.f32 0.0, %v883
        %885 = vmatprep.mubr.f32.mxu0 0.0
        %886 = vmatmul.mubr.f32.gmra.mrb[0].mxu0 %v690
        %v887 = vpop.f32.mrb[0].mxu0
        %v888 = vadd.f32 0.0, %v887
        %v889 = vpop.f32.mrb[0].mxu0
        %v890 = vadd.f32 0.0, %v889
        %891 = vmatprep.mubr.f32.mxu0 0.0
        %892 = vmatmul.mubr.f32.gmra.mrb[0].mxu0 %v693
        %v893 = vpop.f32.mrb[0].mxu0
        %v894 = vadd.f32 0.0, %v893
        %v895 = vpop.f32.mrb[0].mxu0
        %v896 = vadd.f32 0.0, %v895
        %897 = vmatprep.mubr.f32.mxu0 0.0
        %898 = vmatmul.mubr.f32.gmra.mrb[0].mxu0 %v696
        %v899 = vpop.f32.mrb[0].mxu0
        %v900 = vadd.f32 0.0, %v899
        %v901 = vpop.f32.mrb[0].mxu0
        %v902 = vadd.f32 0.0, %v901
        %903 = vmatprep.mubr.f32.mxu0 0.0
        %904 = vmatmul.mubr.f32.gmra.mrb[0].mxu0 %v699
        %v905 = vpop.f32.mrb[0].mxu0
        %v906 = vadd.f32 0.0, %v905
        %v907 = vpop.f32.mrb[0].mxu0
        %v908 = vadd.f32 0.0, %v907
        %909 = vmatprep.mubr.f32.mxu0 0.0
        %910 = vmatmul.mubr.f32.gmra.mrb[0].mxu0 %v702
        %v911 = vpop.f32.mrb[0].mxu0
        %v912 = vadd.f32 0.0, %v911
        %v913 = vpop.f32.mrb[0].mxu0
        %v914 = vadd.f32 0.0, %v913
        %915 = vmatprep.mubr.f32.mxu0 0.0
        %916 = vmatmul.mubr.f32.gmra.mrb[0].mxu0 %v705
        %v917 = vpop.f32.mrb[0].mxu0
        %v918 = vadd.f32 0.0, %v917
        %v919 = vpop.f32.mrb[0].mxu0
        %v920 = vadd.f32 0.0, %v919
        %921 = vmatprep.mubr.f32.mxu0 0.0
        %922 = vmatmul.mubr.f32.gmra.mrb[0].mxu0 %v708
        %v923 = vpop.f32.mrb[0].mxu0
        %v924 = vadd.f32 0.0, %v923
        %v925 = vpop.f32.mrb[0].mxu0
        %v926 = vadd.f32 0.0, %v925
        %927 = vmatprep.mubr.f32.mxu0 0.0
        %928 = vmatmul.mubr.f32.gmra.mrb[0].mxu0 %v711
        %v929 = vpop.f32.mrb[0].mxu0
        %v930 = vadd.f32 0.0, %v929
        %v931 = vpop.f32.mrb[0].mxu0
        %v932 = vadd.f32 0.0, %v931
        %933 = vmatprep.mubr.f32.mxu0 0.0
        %934 = vmatmul.mubr.f32.gmra.mrb[0].mxu0 %v714
        %v935 = vpop.f32.mrb[0].mxu0
        %v936 = vadd.f32 0.0, %v935
        %v937 = vpop.f32.mrb[0].mxu0
        %v938 = vadd.f32 0.0, %v937
        %939 = vmatprep.mubr.f32.mxu0 0.0
        %940 = vmatmul.mubr.f32.gmra.mrb[0].mxu0 %v717
        %v941 = vpop.f32.mrb[0].mxu0
        %v942 = vadd.f32 0.0, %v941
        %v943 = vpop.f32.mrb[0].mxu0
        %v944 = vadd.f32 0.0, %v943
        %945 = vmatprep.mubr.f32.mxu0 0.0
        %946 = vmatmul.mubr.f32.gmra.mrb[0].mxu0 %v720
        %v947 = vpop.f32.mrb[0].mxu0
        %v948 = vadd.f32 0.0, %v947
        %v949 = vpop.f32.mrb[0].mxu0
        %v950 = vadd.f32 0.0, %v949
        %951 = vmatprep.mubr.f32.mxu0 0.0
        %952 = vmatmul.mubr.f32.gmra.mrb[0].mxu0 %v723
        %v953 = vpop.f32.mrb[0].mxu0
        %v954 = vadd.f32 0.0, %v953
        %v955 = vpop.f32.mrb[0].mxu0
        %v956 = vadd.f32 0.0, %v955
        %957 = vmatprep.mubr.f32.mxu0 0.0
        %958 = vmatmul.mubr.f32.gmra.mrb[0].mxu0 %v726
        %v959 = vpop.f32.mrb[0].mxu0
        %v960 = vadd.f32 0.0, %v959
        %v961 = vpop.f32.mrb[0].mxu0
        %v962 = vadd.f32 0.0, %v961
        %963 = vmatprep.mubr.f32.mxu0 0.0
        %964 = vmatmul.mubr.f32.gmra.mrb[0].mxu0 %v729
        %v965 = vpop.f32.mrb[0].mxu0
        %v966 = vadd.f32 0.0, %v965
        %v967 = vpop.f32.mrb[0].mxu0
        %v968 = vadd.f32 0.0, %v967
        %969 = vmatprep.mubr.f32.mxu0 0.0
        %970 = vmatmul.mubr.f32.gmra.mrb[0].mxu0 %v732
        %v971 = vpop.f32.mrb[0].mxu0
        %v972 = vadd.f32 0.0, %v971
        %v973 = vpop.f32.mrb[0].mxu0
        %v974 = vadd.f32 0.0, %v973
        %975 = vmatprep.mubr.f32.mxu0 0.0
        %976 = vmatmul.mubr.f32.gmra.mrb[0].mxu0 %v735
        %v977 = vpop.f32.mrb[0].mxu0
        %v978 = vadd.f32 0.0, %v977
        %v979 = vpop.f32.mrb[0].mxu0
        %v980 = vadd.f32 0.0, %v979
        %981 = vmatprep.mubr.f32.mxu0 0.0
        %982 = vmatmul.mubr.f32.gmra.mrb[0].mxu0 %v738
        %v983 = vpop.f32.mrb[0].mxu0
        %v984 = vadd.f32 0.0, %v983
        %v985 = vpop.f32.mrb[0].mxu0
        %v986 = vadd.f32 0.0, %v985
        %987 = vmatprep.mubr.f32.mxu0 0.0
        %988 = vmatmul.mubr.f32.gmra.mrb[0].mxu0 %v741
        %v989 = vpop.f32.mrb[0].mxu0
        %v990 = vadd.f32 0.0, %v989
        %v991 = vpop.f32.mrb[0].mxu0
        %v992 = vadd.f32 0.0, %v991
        %993 = vmatprep.mubr.f32.mxu0 0.0
        %994 = vmatmul.mubr.f32.gmra.mrb[0].mxu0 %v744
        %v995 = vpop.f32.mrb[0].mxu0
        %v996 = vadd.f32 0.0, %v995
        %v997 = vpop.f32.mrb[0].mxu0
        %v998 = vadd.f32 0.0, %v997
        %999 = vmatprep.mubr.f32.mxu0 0.0
        %1000 = vmatmul.mubr.f32.gmra.mrb[0].mxu0 %v747
        %v1001 = vpop.f32.mrb[0].mxu0
        %v1002 = vadd.f32 0.0, %v1001
        %v1003 = vpop.f32.mrb[0].mxu0
        %v1004 = vadd.f32 0.0, %v1003
        %1005 = vdwg.mxu0
        %v1006 = vand.u32 2147483647, %v816
        %v1007 = vand.u32 2147483647, %v818
        %v1008 = vand.u32 2147483647, %v822
        %v1009 = vand.u32 2147483647, %v824
        %v1010 = vand.u32 2147483647, %v828
        %v1011 = vand.u32 2147483647, %v830
        %v1012 = vand.u32 2147483647, %v834
        %v1013 = vand.u32 2147483647, %v836
        %v1014 = vand.u32 2147483647, %v840
        %v1015 = vand.u32 2147483647, %v842
        %v1016 = vand.u32 2147483647, %v846
        %v1017 = vand.u32 2147483647, %v848
        %v1018 = vand.u32 2147483647, %v852
        %v1019 = vand.u32 2147483647, %v854
        %v1020 = vand.u32 2147483647, %v858
        %v1021 = vand.u32 2147483647, %v860
        %v1022 = vand.u32 2147483647, %v864
        %v1023 = vand.u32 2147483647, %v866
        %v1024 = vand.u32 2147483647, %v870
        %v1025 = vand.u32 2147483647, %v872
        %v1026 = vand.u32 2147483647, %v876
        %v1027 = vand.u32 2147483647, %v878
        %v1028 = vand.u32 2147483647, %v882
        %v1029 = vand.u32 2147483647, %v884
        %v1030 = vand.u32 2147483647, %v888
        %v1031 = vand.u32 2147483647, %v890
        %v1032 = vand.u32 2147483647, %v894
        %v1033 = vand.u32 2147483647, %v896
        %v1034 = vand.u32 2147483647, %v900
        %v1035 = vand.u32 2147483647, %v902
        %v1036 = vand.u32 2147483647, %v906
        %v1037 = vand.u32 2147483647, %v908
        %v1038 = vand.u32 2147483647, %v912
        %v1039 = vand.u32 2147483647, %v914
        %v1040 = vand.u32 2147483647, %v918
        %v1041 = vand.u32 2147483647, %v920
        %v1042 = vand.u32 2147483647, %v924
        %v1043 = vand.u32 2147483647, %v926
        %v1044 = vand.u32 2147483647, %v930
        %v1045 = vand.u32 2147483647, %v932
        %v1046 = vand.u32 2147483647, %v936
        %v1047 = vand.u32 2147483647, %v938
        %v1048 = vand.u32 2147483647, %v942
        %v1049 = vand.u32 2147483647, %v944
        %v1050 = vand.u32 2147483647, %v948
        %v1051 = vand.u32 2147483647, %v950
        %v1052 = vand.u32 2147483647, %v954
        %v1053 = vand.u32 2147483647, %v956
        %v1054 = vand.u32 2147483647, %v960
        %v1055 = vand.u32 2147483647, %v962
        %v1056 = vand.u32 2147483647, %v966
        %v1057 = vand.u32 2147483647, %v968
        %v1058 = vand.u32 2147483647, %v972
        %v1059 = vand.u32 2147483647, %v974
        %v1060 = vand.u32 2147483647, %v978
        %v1061 = vand.u32 2147483647, %v980
        %v1062 = vand.u32 2147483647, %v984
        %v1063 = vand.u32 2147483647, %v986
        %v1064 = vand.u32 2147483647, %v990
        %v1065 = vand.u32 2147483647, %v992
        %v1066 = vand.u32 2147483647, %v996
        %v1067 = vand.u32 2147483647, %v998
        %v1068 = vand.u32 2147483647, %v1002
        %v1069 = vand.u32 2147483647, %v1004
        %v1070 = vadd.f32 %v1006, %v1008
        %v1071 = vadd.f32 %v1070, %v1010
        %v1072 = vadd.f32 %v1071, %v1012
        %v1073 = vadd.f32 %v1072, %v1014
        %v1074 = vadd.f32 %v1073, %v1016
        %v1075 = vadd.f32 %v1074, %v1018
        %v1076 = vadd.f32 %v1075, %v1020
        %v1077 = vadd.f32 %v1076, %v1022
        %v1078 = vadd.f32 %v1077, %v1024
        %v1079 = vadd.f32 %v1078, %v1026
        %v1080 = vadd.f32 %v1079, %v1028
        %v1081 = vadd.f32 %v1080, %v1030
        %v1082 = vadd.f32 %v1081, %v1032
        %v1083 = vadd.f32 %v1082, %v1034
        %v1084 = vadd.f32 %v1083, %v1036
        %v1085 = vadd.f32 %v1084, %v1038
        %v1086 = vadd.f32 %v1085, %v1040
        %v1087 = vadd.f32 %v1086, %v1042
        %v1088 = vadd.f32 %v1087, %v1044
        %v1089 = vadd.f32 %v1088, %v1046
        %v1090 = vadd.f32 %v1089, %v1048
        %v1091 = vadd.f32 %v1090, %v1050
        %v1092 = vadd.f32 %v1091, %v1052
        %v1093 = vadd.f32 %v1092, %v1054
        %v1094 = vadd.f32 %v1093, %v1056
        %v1095 = vadd.f32 %v1094, %v1058
        %v1096 = vadd.f32 %v1095, %v1060
        %v1097 = vadd.f32 %v1096, %v1062
        %v1098 = vadd.f32 %v1097, %v1064
        %v1099 = vadd.f32 %v1098, %v1066
        %v1100 = vadd.f32 %v1099, %v1068
        %v1101 = vrot.slane %v1100, 4
        %v1102 = vadd.f32 %v1100, %v1101
        %v1103 = vrot.slane %v1102, 2
        %v1104 = vadd.f32 %v1102, %v1103
        %v1105 = vrot.slane %v1104, 1
        %v1106 = vadd.f32 %v1104, %v1105
        %v1107 = vadd.f32 %v1007, %v1009
        %v1108 = vadd.f32 %v1107, %v1011
        %v1109 = vadd.f32 %v1108, %v1013
        %v1110 = vadd.f32 %v1109, %v1015
        %v1111 = vadd.f32 %v1110, %v1017
        %v1112 = vadd.f32 %v1111, %v1019
        %v1113 = vadd.f32 %v1112, %v1021
        %v1114 = vadd.f32 %v1113, %v1023
        %v1115 = vadd.f32 %v1114, %v1025
        %v1116 = vadd.f32 %v1115, %v1027
        %v1117 = vadd.f32 %v1116, %v1029
        %v1118 = vadd.f32 %v1117, %v1031
        %v1119 = vadd.f32 %v1118, %v1033
        %v1120 = vadd.f32 %v1119, %v1035
        %v1121 = vadd.f32 %v1120, %v1037
        %v1122 = vadd.f32 %v1121, %v1039
        %v1123 = vadd.f32 %v1122, %v1041
        %v1124 = vadd.f32 %v1123, %v1043
        %v1125 = vadd.f32 %v1124, %v1045
        %v1126 = vadd.f32 %v1125, %v1047
        %v1127 = vadd.f32 %v1126, %v1049
        %v1128 = vadd.f32 %v1127, %v1051
        %v1129 = vadd.f32 %v1128, %v1053
        %v1130 = vadd.f32 %v1129, %v1055
        %v1131 = vadd.f32 %v1130, %v1057
        %v1132 = vadd.f32 %v1131, %v1059
        %v1133 = vadd.f32 %v1132, %v1061
        %v1134 = vadd.f32 %v1133, %v1063
        %v1135 = vadd.f32 %v1134, %v1065
        %v1136 = vadd.f32 %v1135, %v1067
        %v1137 = vadd.f32 %v1136, %v1069
        %v1138 = vrot.slane %v1137, 4
        %v1139 = vadd.f32 %v1137, %v1138
        %v1140 = vrot.slane %v1139, 2
        %v1141 = vadd.f32 %v1139, %v1140
        %v1142 = vrot.slane %v1141, 1
        %v1143 = vadd.f32 %v1141, %v1142
        %v1144 = vmax.f32 %v1106, 1e-12
        %v1145 = vmax.f32 %v1143, 1e-12
        %v1146 = vrcp.pop %v1144
        %v1147 = vrcp.pop %v1145
        %v1148 = vmul.f32 %v816, %v1146
        %v1149 = vmul.f32 %v818, %v1147
        %v1150 = vmul.f32 %v822, %v1146
        %v1151 = vmul.f32 %v824, %v1147
        %v1152 = vmul.f32 %v828, %v1146
        %v1153 = vmul.f32 %v830, %v1147
        %v1154 = vmul.f32 %v834, %v1146
        %v1155 = vmul.f32 %v836, %v1147
        %v1156 = vmul.f32 %v840, %v1146
        %v1157 = vmul.f32 %v842, %v1147
        %v1158 = vmul.f32 %v846, %v1146
        %v1159 = vmul.f32 %v848, %v1147
        %v1160 = vmul.f32 %v852, %v1146
        %v1161 = vmul.f32 %v854, %v1147
        %v1162 = vmul.f32 %v858, %v1146
        %v1163 = vmul.f32 %v860, %v1147
        %v1164 = vmul.f32 %v864, %v1146
        %v1165 = vmul.f32 %v866, %v1147
        %v1166 = vmul.f32 %v870, %v1146
        %v1167 = vmul.f32 %v872, %v1147
        %v1168 = vmul.f32 %v876, %v1146
        %v1169 = vmul.f32 %v878, %v1147
        %v1170 = vmul.f32 %v882, %v1146
        %v1171 = vmul.f32 %v884, %v1147
        %v1172 = vmul.f32 %v888, %v1146
        %v1173 = vmul.f32 %v890, %v1147
        %v1174 = vmul.f32 %v894, %v1146
        %v1175 = vmul.f32 %v896, %v1147
        %v1176 = vmul.f32 %v900, %v1146
        %v1177 = vmul.f32 %v902, %v1147
        %v1178 = vmul.f32 %v906, %v1146
        %v1179 = vmul.f32 %v908, %v1147
        %v1180 = vmul.f32 %v912, %v1146
        %v1181 = vmul.f32 %v914, %v1147
        %v1182 = vmul.f32 %v918, %v1146
        %v1183 = vmul.f32 %v920, %v1147
        %v1184 = vmul.f32 %v924, %v1146
        %v1185 = vmul.f32 %v926, %v1147
        %v1186 = vmul.f32 %v930, %v1146
        %v1187 = vmul.f32 %v932, %v1147
        %v1188 = vmul.f32 %v936, %v1146
        %v1189 = vmul.f32 %v938, %v1147
        %v1190 = vmul.f32 %v942, %v1146
        %v1191 = vmul.f32 %v944, %v1147
        %v1192 = vmul.f32 %v948, %v1146
        %v1193 = vmul.f32 %v950, %v1147
        %v1194 = vmul.f32 %v954, %v1146
        %v1195 = vmul.f32 %v956, %v1147
        %v1196 = vmul.f32 %v960, %v1146
        %v1197 = vmul.f32 %v962, %v1147
        %v1198 = vmul.f32 %v966, %v1146
        %v1199 = vmul.f32 %v968, %v1147
        %v1200 = vmul.f32 %v972, %v1146
        %v1201 = vmul.f32 %v974, %v1147
        %v1202 = vmul.f32 %v978, %v1146
        %v1203 = vmul.f32 %v980, %v1147
        %v1204 = vmul.f32 %v984, %v1146
        %v1205 = vmul.f32 %v986, %v1147
        %v1206 = vmul.f32 %v990, %v1146
        %v1207 = vmul.f32 %v992, %v1147
        %v1208 = vmul.f32 %v996, %v1146
        %v1209 = vmul.f32 %v998, %v1147
        %v1210 = vmul.f32 %v1002, %v1146
        %v1211 = vmul.f32 %v1004, %v1147
        %v1212 = vtanh.pop %v1148
        %v1213 = vtanh.pop %v1149
        %v1214 = vtanh.pop %v1150
        %v1215 = vtanh.pop %v1151
        %v1216 = vtanh.pop %v1152
        %v1217 = vtanh.pop %v1153
        %v1218 = vtanh.pop %v1154
        %v1219 = vtanh.pop %v1155
        %v1220 = vtanh.pop %v1156
        %v1221 = vtanh.pop %v1157
        %v1222 = vtanh.pop %v1158
        %v1223 = vtanh.pop %v1159
        %v1224 = vtanh.pop %v1160
        %v1225 = vtanh.pop %v1161
        %v1226 = vtanh.pop %v1162
        %v1227 = vtanh.pop %v1163
        %v1228 = vtanh.pop %v1164
        %v1229 = vtanh.pop %v1165
        %v1230 = vtanh.pop %v1166
        %v1231 = vtanh.pop %v1167
        %v1232 = vtanh.pop %v1168
        %v1233 = vtanh.pop %v1169
        %v1234 = vtanh.pop %v1170
        %v1235 = vtanh.pop %v1171
        %v1236 = vtanh.pop %v1172
        %v1237 = vtanh.pop %v1173
        %v1238 = vtanh.pop %v1174
        %v1239 = vtanh.pop %v1175
        %v1240 = vtanh.pop %v1176
        %v1241 = vtanh.pop %v1177
        %v1242 = vtanh.pop %v1178
        %v1243 = vtanh.pop %v1179
        %v1244 = vtanh.pop %v1180
        %v1245 = vtanh.pop %v1181
        %v1246 = vtanh.pop %v1182
        %v1247 = vtanh.pop %v1183
        %v1248 = vtanh.pop %v1184
        %v1249 = vtanh.pop %v1185
        %v1250 = vtanh.pop %v1186
        %v1251 = vtanh.pop %v1187
        %v1252 = vtanh.pop %v1188
        %v1253 = vtanh.pop %v1189
        %v1254 = vtanh.pop %v1190
        %v1255 = vtanh.pop %v1191
        %v1256 = vtanh.pop %v1192
        %v1257 = vtanh.pop %v1193
        %v1258 = vtanh.pop %v1194
        %v1259 = vtanh.pop %v1195
        %v1260 = vtanh.pop %v1196
        %v1261 = vtanh.pop %v1197
        %v1262 = vtanh.pop %v1198
        %v1263 = vtanh.pop %v1199
        %v1264 = vtanh.pop %v1200
        %v1265 = vtanh.pop %v1201
        %v1266 = vtanh.pop %v1202
        %v1267 = vtanh.pop %v1203
        %v1268 = vtanh.pop %v1204
        %v1269 = vtanh.pop %v1205
        %v1270 = vtanh.pop %v1206
        %v1271 = vtanh.pop %v1207
        %v1272 = vtanh.pop %v1208
        %v1273 = vtanh.pop %v1209
        %v1274 = vtanh.pop %v1210
        %v1275 = vtanh.pop %v1211
        %v1276 = vmax.f32 %v1212, 0.0
        %v1277 = vmax.f32 %v1213, 0.0
        %v1278 = vmax.f32 %v1214, 0.0
        %v1279 = vmax.f32 %v1215, 0.0
        %v1280 = vmax.f32 %v1216, 0.0
        %v1281 = vmax.f32 %v1217, 0.0
        %v1282 = vmax.f32 %v1218, 0.0
        %v1283 = vmax.f32 %v1219, 0.0
        %v1284 = vmax.f32 %v1220, 0.0
        %v1285 = vmax.f32 %v1221, 0.0
        %v1286 = vmax.f32 %v1222, 0.0
        %v1287 = vmax.f32 %v1223, 0.0
        %v1288 = vmax.f32 %v1224, 0.0
        %v1289 = vmax.f32 %v1225, 0.0
        %v1290 = vmax.f32 %v1226, 0.0
        %v1291 = vmax.f32 %v1227, 0.0
        %v1292 = vmax.f32 %v1228, 0.0
        %v1293 = vmax.f32 %v1229, 0.0
        %v1294 = vmax.f32 %v1230, 0.0
        %v1295 = vmax.f32 %v1231, 0.0
        %v1296 = vmax.f32 %v1232, 0.0
        %v1297 = vmax.f32 %v1233, 0.0
        %v1298 = vmax.f32 %v1234, 0.0
        %v1299 = vmax.f32 %v1235, 0.0
        %v1300 = vmax.f32 %v1236, 0.0
        %v1301 = vmax.f32 %v1237, 0.0
        %v1302 = vmax.f32 %v1238, 0.0
        %v1303 = vmax.f32 %v1239, 0.0
        %v1304 = vmax.f32 %v1240, 0.0
        %v1305 = vmax.f32 %v1241, 0.0
        %v1306 = vmax.f32 %v1242, 0.0
        %v1307 = vmax.f32 %v1243, 0.0
        %v1308 = vmax.f32 %v1244, 0.0
        %v1309 = vmax.f32 %v1245, 0.0
        %v1310 = vmax.f32 %v1246, 0.0
        %v1311 = vmax.f32 %v1247, 0.0
        %v1312 = vmax.f32 %v1248, 0.0
        %v1313 = vmax.f32 %v1249, 0.0
        %v1314 = vmax.f32 %v1250, 0.0
        %v1315 = vmax.f32 %v1251, 0.0
        %v1316 = vmax.f32 %v1252, 0.0
        %v1317 = vmax.f32 %v1253, 0.0
        %v1318 = vmax.f32 %v1254, 0.0
        %v1319 = vmax.f32 %v1255, 0.0
        %v1320 = vmax.f32 %v1256, 0.0
        %v1321 = vmax.f32 %v1257, 0.0
        %v1322 = vmax.f32 %v1258, 0.0
        %v1323 = vmax.f32 %v1259, 0.0
        %v1324 = vmax.f32 %v1260, 0.0
        %v1325 = vmax.f32 %v1261, 0.0
        %v1326 = vmax.f32 %v1262, 0.0
        %v1327 = vmax.f32 %v1263, 0.0
        %v1328 = vmax.f32 %v1264, 0.0
        %v1329 = vmax.f32 %v1265, 0.0
        %v1330 = vmax.f32 %v1266, 0.0
        %v1331 = vmax.f32 %v1267, 0.0
        %v1332 = vmax.f32 %v1268, 0.0
        %v1333 = vmax.f32 %v1269, 0.0
        %v1334 = vmax.f32 %v1270, 0.0
        %v1335 = vmax.f32 %v1271, 0.0
        %v1336 = vmax.f32 %v1272, 0.0
        %v1337 = vmax.f32 %v1273, 0.0
        %v1338 = vmax.f32 %v1274, 0.0
        %v1339 = vmax.f32 %v1275, 0.0
        %vm1340 = vcmp.lt.f32.partialorder %v1276, 0.1
        %vm1341 = vcmp.lt.f32.partialorder %v1277, 0.1
        %vm1342 = vcmp.lt.f32.partialorder %v1278, 0.1
        %vm1343 = vcmp.lt.f32.partialorder %v1279, 0.1
        %vm1344 = vcmp.lt.f32.partialorder %v1280, 0.1
        %vm1345 = vcmp.lt.f32.partialorder %v1281, 0.1
        %vm1346 = vcmp.lt.f32.partialorder %v1282, 0.1
        %vm1347 = vcmp.lt.f32.partialorder %v1283, 0.1
        %vm1348 = vcmp.lt.f32.partialorder %v1284, 0.1
        %vm1349 = vcmp.lt.f32.partialorder %v1285, 0.1
        %vm1350 = vcmp.lt.f32.partialorder %v1286, 0.1
        %vm1351 = vcmp.lt.f32.partialorder %v1287, 0.1
        %vm1352 = vcmp.lt.f32.partialorder %v1288, 0.1
        %vm1353 = vcmp.lt.f32.partialorder %v1289, 0.1
        %vm1354 = vcmp.lt.f32.partialorder %v1290, 0.1
        %vm1355 = vcmp.lt.f32.partialorder %v1291, 0.1
        %vm1356 = vcmp.lt.f32.partialorder %v1292, 0.1
        %vm1357 = vcmp.lt.f32.partialorder %v1293, 0.1
        %vm1358 = vcmp.lt.f32.partialorder %v1294, 0.1
        %vm1359 = vcmp.lt.f32.partialorder %v1295, 0.1
        %vm1360 = vcmp.lt.f32.partialorder %v1296, 0.1
        %vm1361 = vcmp.lt.f32.partialorder %v1297, 0.1
        %vm1362 = vcmp.lt.f32.partialorder %v1298, 0.1
        %vm1363 = vcmp.lt.f32.partialorder %v1299, 0.1
        %vm1364 = vcmp.lt.f32.partialorder %v1300, 0.1
        %vm1365 = vcmp.lt.f32.partialorder %v1301, 0.1
        %vm1366 = vcmp.lt.f32.partialorder %v1302, 0.1
        %vm1367 = vcmp.lt.f32.partialorder %v1303, 0.1
        %vm1368 = vcmp.lt.f32.partialorder %v1304, 0.1
        %vm1369 = vcmp.lt.f32.partialorder %v1305, 0.1
        %vm1370 = vcmp.lt.f32.partialorder %v1306, 0.1
        %vm1371 = vcmp.lt.f32.partialorder %v1307, 0.1
        %vm1372 = vcmp.lt.f32.partialorder %v1308, 0.1
        %vm1373 = vcmp.lt.f32.partialorder %v1309, 0.1
        %vm1374 = vcmp.lt.f32.partialorder %v1310, 0.1
        %vm1375 = vcmp.lt.f32.partialorder %v1311, 0.1
        %vm1376 = vcmp.lt.f32.partialorder %v1312, 0.1
        %vm1377 = vcmp.lt.f32.partialorder %v1313, 0.1
        %vm1378 = vcmp.lt.f32.partialorder %v1314, 0.1
        %vm1379 = vcmp.lt.f32.partialorder %v1315, 0.1
        %vm1380 = vcmp.lt.f32.partialorder %v1316, 0.1
        %vm1381 = vcmp.lt.f32.partialorder %v1317, 0.1
        %vm1382 = vcmp.lt.f32.partialorder %v1318, 0.1
        %vm1383 = vcmp.lt.f32.partialorder %v1319, 0.1
        %vm1384 = vcmp.lt.f32.partialorder %v1320, 0.1
        %vm1385 = vcmp.lt.f32.partialorder %v1321, 0.1
        %vm1386 = vcmp.lt.f32.partialorder %v1322, 0.1
        %vm1387 = vcmp.lt.f32.partialorder %v1323, 0.1
        %vm1388 = vcmp.lt.f32.partialorder %v1324, 0.1
        %vm1389 = vcmp.lt.f32.partialorder %v1325, 0.1
        %vm1390 = vcmp.lt.f32.partialorder %v1326, 0.1
        %vm1391 = vcmp.lt.f32.partialorder %v1327, 0.1
        %vm1392 = vcmp.lt.f32.partialorder %v1328, 0.1
        %vm1393 = vcmp.lt.f32.partialorder %v1329, 0.1
        %vm1394 = vcmp.lt.f32.partialorder %v1330, 0.1
        %vm1395 = vcmp.lt.f32.partialorder %v1331, 0.1
        %vm1396 = vcmp.lt.f32.partialorder %v1332, 0.1
        %vm1397 = vcmp.lt.f32.partialorder %v1333, 0.1
        %vm1398 = vcmp.lt.f32.partialorder %v1334, 0.1
        %vm1399 = vcmp.lt.f32.partialorder %v1335, 0.1
        %vm1400 = vcmp.lt.f32.partialorder %v1336, 0.1
        %vm1401 = vcmp.lt.f32.partialorder %v1337, 0.1
        %vm1402 = vcmp.lt.f32.partialorder %v1338, 0.1
        %vm1403 = vcmp.lt.f32.partialorder %v1339, 0.1
        %v1404 = vsel %vm1340, 0.0, %v1276
        %v1405 = vsel %vm1341, 0.0, %v1277
        %v1406 = vsel %vm1342, 0.0, %v1278
        %v1407 = vsel %vm1343, 0.0, %v1279
        %v1408 = vsel %vm1344, 0.0, %v1280
        %v1409 = vsel %vm1345, 0.0, %v1281
        %v1410 = vsel %vm1346, 0.0, %v1282
        %v1411 = vsel %vm1347, 0.0, %v1283
        %v1412 = vsel %vm1348, 0.0, %v1284
        %v1413 = vsel %vm1349, 0.0, %v1285
        %v1414 = vsel %vm1350, 0.0, %v1286
        %v1415 = vsel %vm1351, 0.0, %v1287
        %v1416 = vsel %vm1352, 0.0, %v1288
        %v1417 = vsel %vm1353, 0.0, %v1289
        %v1418 = vsel %vm1354, 0.0, %v1290
        %v1419 = vsel %vm1355, 0.0, %v1291
        %v1420 = vsel %vm1356, 0.0, %v1292
        %v1421 = vsel %vm1357, 0.0, %v1293
        %v1422 = vsel %vm1358, 0.0, %v1294
        %v1423 = vsel %vm1359, 0.0, %v1295
        %v1424 = vsel %vm1360, 0.0, %v1296
        %v1425 = vsel %vm1361, 0.0, %v1297
        %v1426 = vsel %vm1362, 0.0, %v1298
        %v1427 = vsel %vm1363, 0.0, %v1299
        %v1428 = vsel %vm1364, 0.0, %v1300
        %v1429 = vsel %vm1365, 0.0, %v1301
        %v1430 = vsel %vm1366, 0.0, %v1302
        %v1431 = vsel %vm1367, 0.0, %v1303
        %v1432 = vsel %vm1368, 0.0, %v1304
        %v1433 = vsel %vm1369, 0.0, %v1305
        %v1434 = vsel %vm1370, 0.0, %v1306
        %v1435 = vsel %vm1371, 0.0, %v1307
        %v1436 = vsel %vm1372, 0.0, %v1308
        %v1437 = vsel %vm1373, 0.0, %v1309
        %v1438 = vsel %vm1374, 0.0, %v1310
        %v1439 = vsel %vm1375, 0.0, %v1311
        %v1440 = vsel %vm1376, 0.0, %v1312
        %v1441 = vsel %vm1377, 0.0, %v1313
        %v1442 = vsel %vm1378, 0.0, %v1314
        %v1443 = vsel %vm1379, 0.0, %v1315
        %v1444 = vsel %vm1380, 0.0, %v1316
        %v1445 = vsel %vm1381, 0.0, %v1317
        %v1446 = vsel %vm1382, 0.0, %v1318
        %v1447 = vsel %vm1383, 0.0, %v1319
        %v1448 = vsel %vm1384, 0.0, %v1320
        %v1449 = vsel %vm1385, 0.0, %v1321
        %v1450 = vsel %vm1386, 0.0, %v1322
        %v1451 = vsel %vm1387, 0.0, %v1323
        %v1452 = vsel %vm1388, 0.0, %v1324
        %v1453 = vsel %vm1389, 0.0, %v1325
        %v1454 = vsel %vm1390, 0.0, %v1326
        %v1455 = vsel %vm1391, 0.0, %v1327
        %v1456 = vsel %vm1392, 0.0, %v1328
        %v1457 = vsel %vm1393, 0.0, %v1329
        %v1458 = vsel %vm1394, 0.0, %v1330
        %v1459 = vsel %vm1395, 0.0, %v1331
        %v1460 = vsel %vm1396, 0.0, %v1332
        %v1461 = vsel %vm1397, 0.0, %v1333
        %v1462 = vsel %vm1398, 0.0, %v1334
        %v1463 = vsel %vm1399, 0.0, %v1335
        %v1464 = vsel %vm1400, 0.0, %v1336
        %v1465 = vsel %vm1401, 0.0, %v1337
        %v1466 = vsel %vm1402, 0.0, %v1338
        %v1467 = vsel %vm1403, 0.0, %v1339
        %1468 = vst [vmem:[%s166] sm:$0xff] %v1404
        %1469 = vst [vmem:[%s166 + $0x8] sm:$0xff] %v1405
        %1470 = vst [vmem:[%s166 + $0x10] sm:$0xff] %v1406
        %1471 = vst [vmem:[%s166 + $0x18] sm:$0xff] %v1407
        %1472 = vst [vmem:[%s166 + $0x20] sm:$0xff] %v1408
        %1473 = vst [vmem:[%s166 + $0x28] sm:$0xff] %v1409
        %1474 = vst [vmem:[%s166 + $0x30] sm:$0xff] %v1410
        %1475 = vst [vmem:[%s166 + $0x38] sm:$0xff] %v1411
        %1476 = vst [vmem:[%s166 + $0x40] sm:$0xff] %v1412
        %1477 = vst [vmem:[%s166 + $0x48] sm:$0xff] %v1413
        %1478 = vst [vmem:[%s166 + $0x50] sm:$0xff] %v1414
        %1479 = vst [vmem:[%s166 + $0x58] sm:$0xff] %v1415
        %1480 = vst [vmem:[%s166 + $0x60] sm:$0xff] %v1416
        %1481 = vst [vmem:[%s166 + $0x68] sm:$0xff] %v1417
        %1482 = vst [vmem:[%s166 + $0x70] sm:$0xff] %v1418
        %1483 = vst [vmem:[%s166 + $0x78] sm:$0xff] %v1419
        %1484 = vst [vmem:[%s166 + $0x80] sm:$0xff] %v1420
        %1485 = vst [vmem:[%s166 + $0x88] sm:$0xff] %v1421
        %1486 = vst [vmem:[%s166 + $0x90] sm:$0xff] %v1422
        %1487 = vst [vmem:[%s166 + $0x98] sm:$0xff] %v1423
        %1488 = vst [vmem:[%s166 + $0xa0] sm:$0xff] %v1424
        %1489 = vst [vmem:[%s166 + $0xa8] sm:$0xff] %v1425
        %1490 = vst [vmem:[%s166 + $0xb0] sm:$0xff] %v1426
        %1491 = vst [vmem:[%s166 + $0xb8] sm:$0xff] %v1427
        %1492 = vst [vmem:[%s166 + $0xc0] sm:$0xff] %v1428
        %1493 = vst [vmem:[%s166 + $0xc8] sm:$0xff] %v1429
        %1494 = vst [vmem:[%s166 + $0xd0] sm:$0xff] %v1430
        %1495 = vst [vmem:[%s166 + $0xd8] sm:$0xff] %v1431
        %1496 = vst [vmem:[%s166 + $0xe0] sm:$0xff] %v1432
        %1497 = vst [vmem:[%s166 + $0xe8] sm:$0xff] %v1433
        %1498 = vst [vmem:[%s166 + $0xf0] sm:$0xff] %v1434
        %1499 = vst [vmem:[%s166 + $0xf8] sm:$0xff] %v1435
        %1500 = vst [vmem:[%s166 + $0x100] sm:$0xff] %v1436
        %1501 = vst [vmem:[%s166 + $0x108] sm:$0xff] %v1437
        %1502 = vst [vmem:[%s166 + $0x110] sm:$0xff] %v1438
        %1503 = vst [vmem:[%s166 + $0x118] sm:$0xff] %v1439
        %1504 = vst [vmem:[%s166 + $0x120] sm:$0xff] %v1440
        %1505 = vst [vmem:[%s166 + $0x128] sm:$0xff] %v1441
        %1506 = vst [vmem:[%s166 + $0x130] sm:$0xff] %v1442
        %1507 = vst [vmem:[%s166 + $0x138] sm:$0xff] %v1443
        %1508 = vst [vmem:[%s166 + $0x140] sm:$0xff] %v1444
        %1509 = vst [vmem:[%s166 + $0x148] sm:$0xff] %v1445
        %1510 = vst [vmem:[%s166 + $0x150] sm:$0xff] %v1446
        %1511 = vst [vmem:[%s166 + $0x158] sm:$0xff] %v1447
        %1512 = vst [vmem:[%s166 + $0x160] sm:$0xff] %v1448
        %1513 = vst [vmem:[%s166 + $0x168] sm:$0xff] %v1449
        %1514 = vst [vmem:[%s166 + $0x170] sm:$0xff] %v1450
        %1515 = vst [vmem:[%s166 + $0x178] sm:$0xff] %v1451
        %1516 = vst [vmem:[%s166 + $0x180] sm:$0xff] %v1452
        %1517 = vst [vmem:[%s166 + $0x188] sm:$0xff] %v1453
        %1518 = vst [vmem:[%s166 + $0x190] sm:$0xff] %v1454
        %1519 = vst [vmem:[%s166 + $0x198] sm:$0xff] %v1455
        %1520 = vst [vmem:[%s166 + $0x1a0] sm:$0xff] %v1456
        %1521 = vst [vmem:[%s166 + $0x1a8] sm:$0xff] %v1457
        %1522 = vst [vmem:[%s166 + $0x1b0] sm:$0xff] %v1458
        %1523 = vst [vmem:[%s166 + $0x1b8] sm:$0xff] %v1459
        %1524 = vst [vmem:[%s166 + $0x1c0] sm:$0xff] %v1460
        %1525 = vst [vmem:[%s166 + $0x1c8] sm:$0xff] %v1461
        %1526 = vst [vmem:[%s166 + $0x1d0] sm:$0xff] %v1462
        %1527 = vst [vmem:[%s166 + $0x1d8] sm:$0xff] %v1463
        %1528 = vst [vmem:[%s166 + $0x1e0] sm:$0xff] %v1464
        %1529 = vst [vmem:[%s166 + $0x1e8] sm:$0xff] %v1465
        %1530 = vst [vmem:[%s166 + $0x1f0] sm:$0xff] %v1466
        %1531 = vst [vmem:[%s166 + $0x1f8] sm:$0xff] %v1467
        %s1532 = sand.u32 %s90, 1
        %s1533 = scalar_lea.sflag [#allocation3], %s1532
        %s1534 = sand.u32 %s90, 1
        %s1535 = smul.addr %s1534, 512
        %s1536 = scalar_lea.vmem [#allocation2], %s1535
        // Predicated region
        $region29: #{tpu_custom_call.1} parent=27 // pred_check
          %p1537 = pneg %p100
        $region30: #{tpu_custom_call.1} parent=27 // pred_check_branch
          %1539 = sbr.rel (%p1537) target = $region32
        $region31: #{tpu_custom_call.1} parent=27 // pred_region
          %s1540 = smul.u32 2, %s20
          %s1542 = ssub.s32 8192, 8192
          %1543 = vsyncadd %s1533, %s1542
          %s1544 = smul.addr %s21, 64
          %s1545 = sadd.s32 %s1540, %s1544
          %s1546 = smul.addr %s1545, 128
          %s1547 = scalar_lea.hbm %s2, %s1546
          %s1548 = sshll.u32 %s1536, 4
          %s1549 = int_to_ptr.vmem [resolvable:$true] %s1548
          %1554 = dma.vmem_to_hbm [thread:$0]  %s1549, 8192, %s1547, %s1533, 256, 256, 16
        $region32: #{tpu_custom_call.1} parent=27 // pred_fallthru
          _
      $region28: #{tpu_custom_call.1} parent=5 // pred_fallthru
        _
      %p1555 = scmp.le.s32.totalorder 2, %s11
      // Predicated region
      $region33: #{tpu_custom_call.1} parent=5 // pred_check
        %p1556 = pneg %p1555
      $region34: #{tpu_custom_call.1} parent=5 // pred_check_branch
        %1558 = sbr.rel (%p1556) target = $region36
      $region35: #{tpu_custom_call.1} parent=5 // pred_region
        %s1559 = ssub.s32 %s11, 2
        // Predicated region
        $region37: #{tpu_custom_call.1} parent=35 // pred_check
          %p1560 = pneg %p106
        $region38: #{tpu_custom_call.1} parent=35 // pred_check_branch
          %1562 = sbr.rel (%p1560) target = $region40
        $region39: #{tpu_custom_call.1} parent=35 // pred_region
          %s1563 = sand.u32 %s91, 1
          %s1564 = scalar_lea.sflag [#allocation3], %s1563
          %s1565 = sand.u32 %s91, 1
          %s1566 = smul.addr %s1565, 512
          %s1567 = scalar_lea.vmem [#allocation2], %s1566
          %1568 = dma.done %s1564, 8192
        $region40: #{tpu_custom_call.1} parent=35 // pred_fallthru
          _
      $region36: #{tpu_custom_call.1} parent=5 // pred_fallthru
        _
    $region6: #{tpu_custom_call.1} parent=1 // loop_footer
      %s15 = sadd.s32 1, %s11
    $region7: #{tpu_custom_call.1} parent=1 // loop_footer_branch
      %10 = sbr.rel target = $region3
    $region8: #{tpu_custom_call.1} parent=1 // loop_exit
      _
    %1569 = vsyncpa [#allocation3], 1
    %s1570 = scalar_lea.sflag [#allocation3], 1
    %1571 = vsyncpa %s1570, 1

</llo_original>
